<compile_context>
chip_gen: v5e
topology: v5e:2x2
jax: 0.10.0
libtpu: 0.0.40
codegen_flags: <defaults>
</compile_context>

<pallas_src>
import math
import functools

import jax
import jax.numpy as jnp
from jax.experimental import pallas as pl
from jax.experimental.pallas import tpu as pltpu

_LN_EPS = 1e-5  # matches torch.nn.LayerNorm default


def _layernorm(x, gamma, beta):
    """LayerNorm over the last dim (biased variance, eps=1e-5), f32 math."""
    mu = jnp.mean(x, axis=-1, keepdims=True)
    xc = x - mu
    var = jnp.mean(xc * xc, axis=-1, keepdims=True)
    inv = jax.lax.rsqrt(var + _LN_EPS)          # EUP
    return xc * inv * gamma + beta


def mab_kernel(*refs, num_heads, ln):
    """One grid step handles `block_b` batch elements (all heads)."""
    if ln:
        (q_ref, k_ref,
         wqt_ref, bq_ref, wkt_ref, bk_ref, wvt_ref, bv_ref, wot_ref, bo_ref,
         g0_ref, be0_ref, g1_ref, be1_ref, o_ref) = refs
    else:
        (q_ref, k_ref,
         wqt_ref, bq_ref, wkt_ref, bk_ref, wvt_ref, bv_ref, wot_ref, bo_ref,
         o_ref) = refs

    bt, nq, dim_q = q_ref.shape
    _, nk, dim_k = k_ref.shape
    dim_v = wqt_ref.shape[1]
    d = dim_v // num_heads
    scale = 1.0 / math.sqrt(dim_v)          # note: sqrt(dim_V), not sqrt(head_dim)
    f32 = jnp.float32

    # ---- Linear projections: one large 2-D MXU matmul per projection --------
    # y = x @ W^T + b, with W^T already materialized as (dim_in, dim_V).
    q2 = q_ref[...].reshape(bt * nq, dim_q)
    k2 = k_ref[...].reshape(bt * nk, dim_k)
    qp = jnp.dot(q2, wqt_ref[...], preferred_element_type=f32) + bq_ref[...]
    kp = jnp.dot(k2, wkt_ref[...], preferred_element_type=f32) + bk_ref[...]
    vp = jnp.dot(k2, wvt_ref[...], preferred_element_type=f32) + bv_ref[...]

    qp3 = qp.reshape(bt, nq, dim_v)          # residual operand (unscaled)
    kp3 = kp.reshape(bt, nk, dim_v)
    vp3 = vp.reshape(bt, nk, dim_v)
    qs3 = qp3 * scale                        # scaled copy used only for scores

    # ---- Multi-head attention, batched over the whole batch tile ------------
    head_outs = []
    for h in range(num_heads):               # static unroll over heads
        sl = slice(h * d, (h + 1) * d)
        qh = qs3[:, :, sl]                   # (Bt, Nq, d)
        kh = kp3[:, :, sl]                   # (Bt, Nk, d)
        vh = vp3[:, :, sl]                   # (Bt, Nk, d)
        # scores: contract last dims, batch over Bt (no explicit transpose)
        s = jax.lax.dot_general(qh, kh, (((2,), (2,)), ((0,), (0,))),
                                preferred_element_type=f32)       # (Bt, Nq, Nk)
        s = s - jnp.max(s, axis=-1, keepdims=True)
        e = jnp.exp(s)
        inv = pl.reciprocal(jnp.sum(e, axis=-1, keepdims=True), approx=True)
        a = e * inv                                               # softmax over Nk
        ctx = jax.lax.dot_general(a, vh, (((2,), (1,)), ((0,), (0,))),
                                  preferred_element_type=f32)     # (Bt, Nq, d)
        head_outs.append(qp3[:, :, sl] + ctx)                     # residual: unscaled Q
    o3 = jnp.concatenate(head_outs, axis=-1)                      # (Bt, Nq, dim_V)

    # ---- optional ln0, then O = O + relu(fc_o(O)), optional ln1 --------------
    o2 = o3.reshape(bt * nq, dim_v)
    if ln:
        o2 = _layernorm(o2, g0_ref[...], be0_ref[...])
    o2 = o2 + jax.nn.relu(
        jnp.dot(o2, wot_ref[...], preferred_element_type=f32) + bo_ref[...])
    if ln:
        o2 = _layernorm(o2, g1_ref[...], be1_ref[...])
    o_ref[...] = o2.reshape(bt, nq, dim_v).astype(o_ref.dtype)


def _pick_block_b(B, target=8):
    """Largest divisor of B that is <= target, leaving >=2 grid steps when B > 1."""
    bb = max(1, min(B, target, B // 2 if B > 1 else 1))
    while B % bb:
        bb -= 1
    return bb


def mab_forward(Q, K, params, num_heads, ln=False, block_b=None):
    B, Nq, dim_Q = Q.shape
    _, Nk, dim_K = K.shape
    dim_V = params["wq"].shape[0]
    if block_b is None:
        block_b = _pick_block_b(B)
    assert B % block_b == 0, "block_b must divide batch"

    # Pre-transpose the nn.Linear weights once outside the kernel (free layout
    # plumbing) so the kernel never transposes.
    wqt = jnp.transpose(params["wq"])   # (dim_Q, dim_V)
    wkt = jnp.transpose(params["wk"])   # (dim_K, dim_V)
    wvt = jnp.transpose(params["wv"])   # (dim_K, dim_V)
    wot = jnp.transpose(params["wo"])   # (dim_V, dim_V)

    kernel = functools.partial(mab_kernel, num_heads=num_heads, ln=ln)

    const2d = lambda b: (0, 0)          # grid-constant weight/bias tiles
    in_specs = [
        pl.BlockSpec((block_b, Nq, dim_Q), lambda b: (b, 0, 0)),   # Q tile
        pl.BlockSpec((block_b, Nk, dim_K), lambda b: (b, 0, 0)),   # K tile
        pl.BlockSpec((dim_Q, dim_V), const2d),                     # Wq^T
        pl.BlockSpec((1, dim_V),     const2d),                     # bq
        pl.BlockSpec((dim_K, dim_V), const2d),                     # Wk^T
        pl.BlockSpec((1, dim_V),     const2d),                     # bk
        pl.BlockSpec((dim_K, dim_V), const2d),                     # Wv^T
        pl.BlockSpec((1, dim_V),     const2d),                     # bv
        pl.BlockSpec((dim_V, dim_V), const2d),                     # Wo^T
        pl.BlockSpec((1, dim_V),     const2d),                     # bo
    ]
    args = [Q, K,
            wqt, params["bq"], wkt, params["bk"],
            wvt, params["bv"], wot, params["bo"]]
    if ln:
        in_specs += [pl.BlockSpec((1, dim_V), const2d)] * 4        # g0, b0, g1, b1
        args += [params["ln0_g"], params["ln0_b"], params["ln1_g"], params["ln1_b"]]

    return pl.pallas_call(
        kernel,
        out_shape=jax.ShapeDtypeStruct((B, Nq, dim_V), Q.dtype),
        grid=(B // block_b,),
        in_specs=in_specs,
        out_specs=pl.BlockSpec((block_b, Nq, dim_V), lambda b: (b, 0, 0)),
        compiler_params=pltpu.CompilerParams(dimension_semantics=("parallel",)),
    )(*args)


def mab_reference(Q, K, params, num_heads, ln=False):
    """Plain-JAX reference mirroring the PyTorch forward."""
    dim_V = params["wq"].shape[0]

    def layernorm(x, g, b):
        mu = jnp.mean(x, axis=-1, keepdims=True)
        var = jnp.mean((x - mu) ** 2, axis=-1, keepdims=True)
        return (x - mu) / jnp.sqrt(var + _LN_EPS) * g + b

    Qp = Q @ params["wq"].T + params["bq"]
    Kp = K @ params["wk"].T + params["bk"]
    Vp = K @ params["wv"].T + params["bv"]
    # split along feature, concat along batch (PyTorch MAB convention)
    Q_ = jnp.concatenate(jnp.split(Qp, num_heads, axis=2), axis=0)
    K_ = jnp.concatenate(jnp.split(Kp, num_heads, axis=2), axis=0)
    V_ = jnp.concatenate(jnp.split(Vp, num_heads, axis=2), axis=0)
    A = jax.nn.softmax(jnp.einsum("bqd,bkd->bqk", Q_, K_) / math.sqrt(dim_V), axis=2)
    O = Q_ + jnp.einsum("bqk,bkd->bqd", A, V_)
    O = jnp.concatenate(jnp.split(O, num_heads, axis=0), axis=2)
    if ln:
        O = layernorm(O, params["ln0_g"], params["ln0_b"])
    O = O + jax.nn.relu(O @ params["wo"].T + params["bo"])
    if ln:
        O = layernorm(O, params["ln1_g"], params["ln1_b"])
    return O


def init_params(key, dim_Q, dim_K, dim_V):
    """Deterministic nn.Linear-style init: U(-1/sqrt(fan_in), 1/sqrt(fan_in))."""
    ks = jax.random.split(key, 10)

    def lin(kw, kb, fan_out, fan_in):
        bound = 1.0 / math.sqrt(fan_in)
        w = jax.random.uniform(kw, (fan_out, fan_in), jnp.float32, -bound, bound)
        b = jax.random.uniform(kb, (1, fan_out), jnp.float32, -bound, bound)
        return w, b

    wq, bq = lin(ks[0], ks[1], dim_V, dim_Q)
    wk, bk = lin(ks[2], ks[3], dim_V, dim_K)
    wv, bv = lin(ks[4], ks[5], dim_V, dim_K)
    wo, bo = lin(ks[6], ks[7], dim_V, dim_V)
    # Non-trivial LayerNorm affine params so the ln=True path is really exercised.
    ln0_g = 1.0 + 0.1 * jax.random.normal(ks[8], (1, dim_V), jnp.float32)
    ln0_b = 0.1 * jax.random.normal(ks[9], (1, dim_V), jnp.float32)
    ln1_g = 1.0 - 0.05 * jax.random.normal(ks[8], (1, dim_V), jnp.float32)
    ln1_b = -0.1 * jax.random.normal(ks[9], (1, dim_V), jnp.float32)
    return dict(wq=wq, bq=bq, wk=wk, bk=bk, wv=wv, bv=bv, wo=wo, bo=bo,
                ln0_g=ln0_g, ln0_b=ln0_b, ln1_g=ln1_g, ln1_b=ln1_b)


if __name__ == "__main__":
    # Small shapes consistent with MAB(dim_Q, dim_K, dim_V, num_heads)
    B, Nq, Nk = 4, 8, 16
    dim_Q, dim_K, dim_V, num_heads = 16, 24, 32, 4

    key = jax.random.PRNGKey(0)
    kq, kk, kp = jax.random.split(key, 3)
    Q = jax.random.normal(kq, (B, Nq, dim_Q), jnp.float32)
    K = jax.random.normal(kk, (B, Nk, dim_K), jnp.float32)
    params = init_params(kp, dim_Q, dim_K, dim_V)

    ok = True
    for ln in (False, True):
        out = mab_forward(Q, K, params, num_heads, ln=ln)  # block_b auto-picked (=2)
        out = jax.block_until_ready(out)
        ref = mab_reference(Q, K, params, num_heads, ln=ln)
        assert out.shape == (B, Nq, dim_V)
        # Tolerance slightly relaxed vs. exact f32 because the softmax denominator
        # uses the EUP approximate reciprocal (rel. err ~1e-4).
        ok &= bool(jnp.allclose(out, ref, atol=2e-3, rtol=2e-3))

    assert ok, "mismatch vs reference"
    print("KERNEL_OK")
</pallas_src>

<mosaic_0001>
module attributes {stable_mosaic.version = 11 : i64} {
  func.func @mab_kernel(%arg0: i32, %arg1: memref<2x8x16xf32, #tpu.memory_space<vmem>>, %arg2: memref<2x16x24xf32, #tpu.memory_space<vmem>>, %arg3: memref<16x32xf32, #tpu.memory_space<vmem>>, %arg4: memref<1x32xf32, #tpu.memory_space<vmem>>, %arg5: memref<24x32xf32, #tpu.memory_space<vmem>>, %arg6: memref<1x32xf32, #tpu.memory_space<vmem>>, %arg7: memref<24x32xf32, #tpu.memory_space<vmem>>, %arg8: memref<1x32xf32, #tpu.memory_space<vmem>>, %arg9: memref<32x32xf32, #tpu.memory_space<vmem>>, %arg10: memref<1x32xf32, #tpu.memory_space<vmem>>, %arg11: memref<2x8x32xf32, #tpu.memory_space<vmem>>) attributes {dimension_semantics = [#tpu.dimension_semantics<parallel>], iteration_bounds = array<i64: 2>, scalar_prefetch = 0 : i64, scratch_operands = 0 : i64, tpu.core_type = #tpu.core_type<tc>, window_params = [{transform_indices = @transform_0, window_bounds = array<i64: 2, 8, 16>}, {transform_indices = @transform_1, window_bounds = array<i64: 2, 16, 24>}, {pipeline_mode = #tpu.pipeline_mode<synchronous>, transform_indices = @transform_2, window_bounds = array<i64: 16, 32>}, {pipeline_mode = #tpu.pipeline_mode<synchronous>, transform_indices = @transform_3, window_bounds = array<i64: 1, 32>}, {pipeline_mode = #tpu.pipeline_mode<synchronous>, transform_indices = @transform_4, window_bounds = array<i64: 24, 32>}, {pipeline_mode = #tpu.pipeline_mode<synchronous>, transform_indices = @transform_5, window_bounds = array<i64: 1, 32>}, {pipeline_mode = #tpu.pipeline_mode<synchronous>, transform_indices = @transform_6, window_bounds = array<i64: 24, 32>}, {pipeline_mode = #tpu.pipeline_mode<synchronous>, transform_indices = @transform_7, window_bounds = array<i64: 1, 32>}, {pipeline_mode = #tpu.pipeline_mode<synchronous>, transform_indices = @transform_8, window_bounds = array<i64: 32, 32>}, {pipeline_mode = #tpu.pipeline_mode<synchronous>, transform_indices = @transform_9, window_bounds = array<i64: 1, 32>}, {transform_indices = @transform_10, window_bounds = array<i64: 2, 8, 32>}]} {
    %c0 = arith.constant 0 : index
    %c0_0 = arith.constant 0 : index
    %c0_1 = arith.constant 0 : index
    %0 = vector.load %arg1[%c0, %c0_0, %c0_1] : memref<2x8x16xf32, #tpu.memory_space<vmem>>, vector<2x8x16xf32>
    %1 = vector.shape_cast %0 : vector<2x8x16xf32> to vector<16x16xf32>
    %c0_2 = arith.constant 0 : index
    %c0_3 = arith.constant 0 : index
    %c0_4 = arith.constant 0 : index
    %2 = vector.load %arg2[%c0_2, %c0_3, %c0_4] : memref<2x16x24xf32, #tpu.memory_space<vmem>>, vector<2x16x24xf32>
    %3 = vector.shape_cast %2 : vector<2x16x24xf32> to vector<32x24xf32>
    %c0_5 = arith.constant 0 : index
    %c0_6 = arith.constant 0 : index
    %4 = vector.load %arg3[%c0_5, %c0_6] : memref<16x32xf32, #tpu.memory_space<vmem>>, vector<16x32xf32>
    %cst = arith.constant dense<0.000000e+00> : vector<16x32xf32>
    %5 = tpu.matmul %1, %4, %cst {dimension_numbers = #tpu.dot_dimension_numbers<[1], [0], [0], [1], [0, 0, 1, 1], [], []>} : vector<16x16xf32>, vector<16x32xf32>, vector<16x32xf32> -> vector<16x32xf32>
    %c0_7 = arith.constant 0 : index
    %c0_8 = arith.constant 0 : index
    %6 = vector.load %arg4[%c0_7, %c0_8] : memref<1x32xf32, #tpu.memory_space<vmem>>, vector<1x32xf32>
    %7 = vector.broadcast %6 : vector<1x32xf32> to vector<16x32xf32>
    %8 = arith.addf %5, %7 : vector<16x32xf32>
    %c0_9 = arith.constant 0 : index
    %c0_10 = arith.constant 0 : index
    %9 = vector.load %arg5[%c0_9, %c0_10] : memref<24x32xf32, #tpu.memory_space<vmem>>, vector<24x32xf32>
    %cst_11 = arith.constant dense<0.000000e+00> : vector<32x32xf32>
    %10 = tpu.matmul %3, %9, %cst_11 {dimension_numbers = #tpu.dot_dimension_numbers<[1], [0], [0], [1], [0, 0, 1, 1], [], []>} : vector<32x24xf32>, vector<24x32xf32>, vector<32x32xf32> -> vector<32x32xf32>
    %c0_12 = arith.constant 0 : index
    %c0_13 = arith.constant 0 : index
    %11 = vector.load %arg6[%c0_12, %c0_13] : memref<1x32xf32, #tpu.memory_space<vmem>>, vector<1x32xf32>
    %12 = vector.broadcast %11 : vector<1x32xf32> to vector<32x32xf32>
    %13 = arith.addf %10, %12 : vector<32x32xf32>
    %c0_14 = arith.constant 0 : index
    %c0_15 = arith.constant 0 : index
    %14 = vector.load %arg7[%c0_14, %c0_15] : memref<24x32xf32, #tpu.memory_space<vmem>>, vector<24x32xf32>
    %cst_16 = arith.constant dense<0.000000e+00> : vector<32x32xf32>
    %15 = tpu.matmul %3, %14, %cst_16 {dimension_numbers = #tpu.dot_dimension_numbers<[1], [0], [0], [1], [0, 0, 1, 1], [], []>} : vector<32x24xf32>, vector<24x32xf32>, vector<32x32xf32> -> vector<32x32xf32>
    %c0_17 = arith.constant 0 : index
    %c0_18 = arith.constant 0 : index
    %16 = vector.load %arg8[%c0_17, %c0_18] : memref<1x32xf32, #tpu.memory_space<vmem>>, vector<1x32xf32>
    %17 = vector.broadcast %16 : vector<1x32xf32> to vector<32x32xf32>
    %18 = arith.addf %15, %17 : vector<32x32xf32>
    %19 = vector.shape_cast %8 : vector<16x32xf32> to vector<2x8x32xf32>
    %20 = vector.shape_cast %13 : vector<32x32xf32> to vector<2x16x32xf32>
    %21 = vector.shape_cast %18 : vector<32x32xf32> to vector<2x16x32xf32>
    %cst_19 = arith.constant 0.176776692 : f32
    %22 = vector.broadcast %cst_19 : f32 to vector<2x8x32xf32>
    %23 = arith.mulf %19, %22 : vector<2x8x32xf32>
    %24 = vector.extract_strided_slice %23 {offsets = [0, 0, 0], sizes = [2, 8, 8], strides = [1, 1, 1]} : vector<2x8x32xf32> to vector<2x8x8xf32>
    %25 = vector.extract_strided_slice %20 {offsets = [0, 0, 0], sizes = [2, 16, 8], strides = [1, 1, 1]} : vector<2x16x32xf32> to vector<2x16x8xf32>
    %26 = vector.extract_strided_slice %21 {offsets = [0, 0, 0], sizes = [2, 16, 8], strides = [1, 1, 1]} : vector<2x16x32xf32> to vector<2x16x8xf32>
    %cst_20 = arith.constant dense<0.000000e+00> : vector<2x8x16xf32>
    %27 = tpu.matmul %24, %25, %cst_20 {dimension_numbers = #tpu.dot_dimension_numbers<[2], [2], [1], [1], [0, 0, 0, 1, 1, 1], [0], [0]>} : vector<2x8x8xf32>, vector<2x16x8xf32>, vector<2x8x16xf32> -> vector<2x8x16xf32>
    %cst_21 = arith.constant dense<0xFF800000> : vector<2x8xf32>
    %28 = vector.multi_reduction <maximumf>, %27, %cst_21 [2] : vector<2x8x16xf32> to vector<2x8xf32>
    %29 = vector.shape_cast %28 : vector<2x8xf32> to vector<2x8x1xf32>
    %30 = vector.broadcast %29 : vector<2x8x1xf32> to vector<2x8x16xf32>
    %31 = arith.subf %27, %30 : vector<2x8x16xf32>
    %32 = math.exp %31 : vector<2x8x16xf32>
    %cst_22 = arith.constant dense<0.000000e+00> : vector<2x8xf32>
    %33 = vector.multi_reduction <add>, %32, %cst_22 [2] : vector<2x8x16xf32> to vector<2x8xf32>
    %34 = vector.shape_cast %33 : vector<2x8xf32> to vector<2x8x1xf32>
    %35 = tpu.reciprocal %34 {approx = true} : vector<2x8x1xf32> -> vector<2x8x1xf32>
    %36 = vector.broadcast %35 : vector<2x8x1xf32> to vector<2x8x16xf32>
    %37 = arith.mulf %32, %36 : vector<2x8x16xf32>
    %cst_23 = arith.constant dense<0.000000e+00> : vector<2x8x8xf32>
    %38 = tpu.matmul %37, %26, %cst_23 {dimension_numbers = #tpu.dot_dimension_numbers<[2], [1], [1], [2], [0, 0, 0, 1, 1, 2], [0], [0]>} : vector<2x8x16xf32>, vector<2x16x8xf32>, vector<2x8x8xf32> -> vector<2x8x8xf32>
    %39 = vector.extract_strided_slice %19 {offsets = [0, 0, 0], sizes = [2, 8, 8], strides = [1, 1, 1]} : vector<2x8x32xf32> to vector<2x8x8xf32>
    %40 = arith.addf %39, %38 : vector<2x8x8xf32>
    %41 = vector.extract_strided_slice %23 {offsets = [0, 0, 8], sizes = [2, 8, 8], strides = [1, 1, 1]} : vector<2x8x32xf32> to vector<2x8x8xf32>
    %42 = vector.extract_strided_slice %20 {offsets = [0, 0, 8], sizes = [2, 16, 8], strides = [1, 1, 1]} : vector<2x16x32xf32> to vector<2x16x8xf32>
    %43 = vector.extract_strided_slice %21 {offsets = [0, 0, 8], sizes = [2, 16, 8], strides = [1, 1, 1]} : vector<2x16x32xf32> to vector<2x16x8xf32>
    %cst_24 = arith.constant dense<0.000000e+00> : vector<2x8x16xf32>
    %44 = tpu.matmul %41, %42, %cst_24 {dimension_numbers = #tpu.dot_dimension_numbers<[2], [2], [1], [1], [0, 0, 0, 1, 1, 1], [0], [0]>} : vector<2x8x8xf32>, vector<2x16x8xf32>, vector<2x8x16xf32> -> vector<2x8x16xf32>
    %cst_25 = arith.constant dense<0xFF800000> : vector<2x8xf32>
    %45 = vector.multi_reduction <maximumf>, %44, %cst_25 [2] : vector<2x8x16xf32> to vector<2x8xf32>
    %46 = vector.shape_cast %45 : vector<2x8xf32> to vector<2x8x1xf32>
    %47 = vector.broadcast %46 : vector<2x8x1xf32> to vector<2x8x16xf32>
    %48 = arith.subf %44, %47 : vector<2x8x16xf32>
    %49 = math.exp %48 : vector<2x8x16xf32>
    %cst_26 = arith.constant dense<0.000000e+00> : vector<2x8xf32>
    %50 = vector.multi_reduction <add>, %49, %cst_26 [2] : vector<2x8x16xf32> to vector<2x8xf32>
    %51 = vector.shape_cast %50 : vector<2x8xf32> to vector<2x8x1xf32>
    %52 = tpu.reciprocal %51 {approx = true} : vector<2x8x1xf32> -> vector<2x8x1xf32>
    %53 = vector.broadcast %52 : vector<2x8x1xf32> to vector<2x8x16xf32>
    %54 = arith.mulf %49, %53 : vector<2x8x16xf32>
    %cst_27 = arith.constant dense<0.000000e+00> : vector<2x8x8xf32>
    %55 = tpu.matmul %54, %43, %cst_27 {dimension_numbers = #tpu.dot_dimension_numbers<[2], [1], [1], [2], [0, 0, 0, 1, 1, 2], [0], [0]>} : vector<2x8x16xf32>, vector<2x16x8xf32>, vector<2x8x8xf32> -> vector<2x8x8xf32>
    %56 = vector.extract_strided_slice %19 {offsets = [0, 0, 8], sizes = [2, 8, 8], strides = [1, 1, 1]} : vector<2x8x32xf32> to vector<2x8x8xf32>
    %57 = arith.addf %56, %55 : vector<2x8x8xf32>
    %58 = vector.extract_strided_slice %23 {offsets = [0, 0, 16], sizes = [2, 8, 8], strides = [1, 1, 1]} : vector<2x8x32xf32> to vector<2x8x8xf32>
    %59 = vector.extract_strided_slice %20 {offsets = [0, 0, 16], sizes = [2, 16, 8], strides = [1, 1, 1]} : vector<2x16x32xf32> to vector<2x16x8xf32>
    %60 = vector.extract_strided_slice %21 {offsets = [0, 0, 16], sizes = [2, 16, 8], strides = [1, 1, 1]} : vector<2x16x32xf32> to vector<2x16x8xf32>
    %cst_28 = arith.constant dense<0.000000e+00> : vector<2x8x16xf32>
    %61 = tpu.matmul %58, %59, %cst_28 {dimension_numbers = #tpu.dot_dimension_numbers<[2], [2], [1], [1], [0, 0, 0, 1, 1, 1], [0], [0]>} : vector<2x8x8xf32>, vector<2x16x8xf32>, vector<2x8x16xf32> -> vector<2x8x16xf32>
    %cst_29 = arith.constant dense<0xFF800000> : vector<2x8xf32>
    %62 = vector.multi_reduction <maximumf>, %61, %cst_29 [2] : vector<2x8x16xf32> to vector<2x8xf32>
    %63 = vector.shape_cast %62 : vector<2x8xf32> to vector<2x8x1xf32>
    %64 = vector.broadcast %63 : vector<2x8x1xf32> to vector<2x8x16xf32>
    %65 = arith.subf %61, %64 : vector<2x8x16xf32>
    %66 = math.exp %65 : vector<2x8x16xf32>
    %cst_30 = arith.constant dense<0.000000e+00> : vector<2x8xf32>
    %67 = vector.multi_reduction <add>, %66, %cst_30 [2] : vector<2x8x16xf32> to vector<2x8xf32>
    %68 = vector.shape_cast %67 : vector<2x8xf32> to vector<2x8x1xf32>
    %69 = tpu.reciprocal %68 {approx = true} : vector<2x8x1xf32> -> vector<2x8x1xf32>
    %70 = vector.broadcast %69 : vector<2x8x1xf32> to vector<2x8x16xf32>
    %71 = arith.mulf %66, %70 : vector<2x8x16xf32>
    %cst_31 = arith.constant dense<0.000000e+00> : vector<2x8x8xf32>
    %72 = tpu.matmul %71, %60, %cst_31 {dimension_numbers = #tpu.dot_dimension_numbers<[2], [1], [1], [2], [0, 0, 0, 1, 1, 2], [0], [0]>} : vector<2x8x16xf32>, vector<2x16x8xf32>, vector<2x8x8xf32> -> vector<2x8x8xf32>
    %73 = vector.extract_strided_slice %19 {offsets = [0, 0, 16], sizes = [2, 8, 8], strides = [1, 1, 1]} : vector<2x8x32xf32> to vector<2x8x8xf32>
    %74 = arith.addf %73, %72 : vector<2x8x8xf32>
    %75 = vector.extract_strided_slice %23 {offsets = [0, 0, 24], sizes = [2, 8, 8], strides = [1, 1, 1]} : vector<2x8x32xf32> to vector<2x8x8xf32>
    %76 = vector.extract_strided_slice %20 {offsets = [0, 0, 24], sizes = [2, 16, 8], strides = [1, 1, 1]} : vector<2x16x32xf32> to vector<2x16x8xf32>
    %77 = vector.extract_strided_slice %21 {offsets = [0, 0, 24], sizes = [2, 16, 8], strides = [1, 1, 1]} : vector<2x16x32xf32> to vector<2x16x8xf32>
    %cst_32 = arith.constant dense<0.000000e+00> : vector<2x8x16xf32>
    %78 = tpu.matmul %75, %76, %cst_32 {dimension_numbers = #tpu.dot_dimension_numbers<[2], [2], [1], [1], [0, 0, 0, 1, 1, 1], [0], [0]>} : vector<2x8x8xf32>, vector<2x16x8xf32>, vector<2x8x16xf32> -> vector<2x8x16xf32>
    %cst_33 = arith.constant dense<0xFF800000> : vector<2x8xf32>
    %79 = vector.multi_reduction <maximumf>, %78, %cst_33 [2] : vector<2x8x16xf32> to vector<2x8xf32>
    %80 = vector.shape_cast %79 : vector<2x8xf32> to vector<2x8x1xf32>
    %81 = vector.broadcast %80 : vector<2x8x1xf32> to vector<2x8x16xf32>
    %82 = arith.subf %78, %81 : vector<2x8x16xf32>
    %83 = math.exp %82 : vector<2x8x16xf32>
    %cst_34 = arith.constant dense<0.000000e+00> : vector<2x8xf32>
    %84 = vector.multi_reduction <add>, %83, %cst_34 [2] : vector<2x8x16xf32> to vector<2x8xf32>
    %85 = vector.shape_cast %84 : vector<2x8xf32> to vector<2x8x1xf32>
    %86 = tpu.reciprocal %85 {approx = true} : vector<2x8x1xf32> -> vector<2x8x1xf32>
    %87 = vector.broadcast %86 : vector<2x8x1xf32> to vector<2x8x16xf32>
    %88 = arith.mulf %83, %87 : vector<2x8x16xf32>
    %cst_35 = arith.constant dense<0.000000e+00> : vector<2x8x8xf32>
    %89 = tpu.matmul %88, %77, %cst_35 {dimension_numbers = #tpu.dot_dimension_numbers<[2], [1], [1], [2], [0, 0, 0, 1, 1, 2], [0], [0]>} : vector<2x8x16xf32>, vector<2x16x8xf32>, vector<2x8x8xf32> -> vector<2x8x8xf32>
    %90 = vector.extract_strided_slice %19 {offsets = [0, 0, 24], sizes = [2, 8, 8], strides = [1, 1, 1]} : vector<2x8x32xf32> to vector<2x8x8xf32>
    %91 = arith.addf %90, %89 : vector<2x8x8xf32>
    %92 = tpu.concatenate %40, %57, %74, %91 in 2 : vector<2x8x8xf32>, vector<2x8x8xf32>, vector<2x8x8xf32>, vector<2x8x8xf32> -> vector<2x8x32xf32>
    %93 = vector.shape_cast %92 : vector<2x8x32xf32> to vector<16x32xf32>
    %c0_36 = arith.constant 0 : index
    %c0_37 = arith.constant 0 : index
    %94 = vector.load %arg9[%c0_36, %c0_37] : memref<32x32xf32, #tpu.memory_space<vmem>>, vector<32x32xf32>
    %cst_38 = arith.constant dense<0.000000e+00> : vector<16x32xf32>
    %95 = tpu.matmul %93, %94, %cst_38 {dimension_numbers = #tpu.dot_dimension_numbers<[1], [0], [0], [1], [0, 0, 1, 1], [], []>} : vector<16x32xf32>, vector<32x32xf32>, vector<16x32xf32> -> vector<16x32xf32>
    %c0_39 = arith.constant 0 : index
    %c0_40 = arith.constant 0 : index
    %96 = vector.load %arg10[%c0_39, %c0_40] : memref<1x32xf32, #tpu.memory_space<vmem>>, vector<1x32xf32>
    %97 = vector.broadcast %96 : vector<1x32xf32> to vector<16x32xf32>
    %98 = arith.addf %95, %97 : vector<16x32xf32>
    %cst_41 = arith.constant 0.000000e+00 : f32
    %99 = vector.broadcast %cst_41 : f32 to vector<16x32xf32>
    %100 = arith.maximumf %98, %99 : vector<16x32xf32>
    %101 = arith.addf %93, %100 : vector<16x32xf32>
    %102 = vector.shape_cast %101 : vector<16x32xf32> to vector<2x8x32xf32>
    %c0_42 = arith.constant 0 : index
    %c0_43 = arith.constant 0 : index
    %c0_44 = arith.constant 0 : index
    %103 = vector.load %arg11[%c0_42, %c0_43, %c0_44] : memref<2x8x32xf32, #tpu.memory_space<vmem>>, vector<2x8x32xf32>
    tpu.vector_store %arg11[%c0_42, %c0_43, %c0_44], %102 {strides = array<i32>} : memref<2x8x32xf32, #tpu.memory_space<vmem>>, vector<2x8x32xf32>,
    return
  }
  func.func @transform_0(%arg0: i32) -> (i32, i32, i32) {
    %c0_i32 = arith.constant 0 : i32
    %c0_i32_0 = arith.constant 0 : i32
    %c0_i32_1 = arith.constant 0 : i32
    return %arg0, %c0_i32, %c0_i32_0 : i32, i32, i32
  }
  func.func @transform_1(%arg0: i32) -> (i32, i32, i32) {
    %c0_i32 = arith.constant 0 : i32
    %c0_i32_0 = arith.constant 0 : i32
    %c0_i32_1 = arith.constant 0 : i32
    return %arg0, %c0_i32, %c0_i32_0 : i32, i32, i32
  }
  func.func @transform_2(%arg0: i32) -> (i32, i32) {
    %c0_i32 = arith.constant 0 : i32
    %c0_i32_0 = arith.constant 0 : i32
    %c0_i32_1 = arith.constant 0 : i32
    return %c0_i32, %c0_i32_0 : i32, i32
  }
  func.func @transform_3(%arg0: i32) -> (i32, i32) {
    %c0_i32 = arith.constant 0 : i32
    %c0_i32_0 = arith.constant 0 : i32
    %c0_i32_1 = arith.constant 0 : i32
    return %c0_i32, %c0_i32_0 : i32, i32
  }
  func.func @transform_4(%arg0: i32) -> (i32, i32) {
    %c0_i32 = arith.constant 0 : i32
    %c0_i32_0 = arith.constant 0 : i32
    %c0_i32_1 = arith.constant 0 : i32
    return %c0_i32, %c0_i32_0 : i32, i32
  }
  func.func @transform_5(%arg0: i32) -> (i32, i32) {
    %c0_i32 = arith.constant 0 : i32
    %c0_i32_0 = arith.constant 0 : i32
    %c0_i32_1 = arith.constant 0 : i32
    return %c0_i32, %c0_i32_0 : i32, i32
  }
  func.func @transform_6(%arg0: i32) -> (i32, i32) {
    %c0_i32 = arith.constant 0 : i32
    %c0_i32_0 = arith.constant 0 : i32
    %c0_i32_1 = arith.constant 0 : i32
    return %c0_i32, %c0_i32_0 : i32, i32
  }
  func.func @transform_7(%arg0: i32) -> (i32, i32) {
    %c0_i32 = arith.constant 0 : i32
    %c0_i32_0 = arith.constant 0 : i32
    %c0_i32_1 = arith.constant 0 : i32
    return %c0_i32, %c0_i32_0 : i32, i32
  }
  func.func @transform_8(%arg0: i32) -> (i32, i32) {
    %c0_i32 = arith.constant 0 : i32
    %c0_i32_0 = arith.constant 0 : i32
    %c0_i32_1 = arith.constant 0 : i32
    return %c0_i32, %c0_i32_0 : i32, i32
  }
  func.func @transform_9(%arg0: i32) -> (i32, i32) {
    %c0_i32 = arith.constant 0 : i32
    %c0_i32_0 = arith.constant 0 : i32
    %c0_i32_1 = arith.constant 0 : i32
    return %c0_i32, %c0_i32_0 : i32, i32
  }
  func.func @transform_10(%arg0: i32) -> (i32, i32, i32) {
    %c0_i32 = arith.constant 0 : i32
    %c0_i32_0 = arith.constant 0 : i32
    %c0_i32_1 = arith.constant 0 : i32
    return %arg0, %c0_i32, %c0_i32_0 : i32, i32, i32
  }
}

</mosaic_0001>

<llo_original>
// kernel: tpu_custom_call.1
$region0: #{tpu_custom_call.1}
  #allocation0 [shape = 'u32[]', space=smem, size = 0x4, offset = 0x4, fixed_abs, tag = 'smem constant byte address 0x4 - core index']
  #allocation1 [shape = 'u32[72,128]{1,0:T(1,128)}', space=vmem, size = 0x9000, scoped, tag = 'internal scratch']
  %s0 = inlined_call_operand.hbm [shape: f32[4,8,16], index: 0, kind: input, shape index: {}]
  %s1 = inlined_call_operand.hbm [shape: f32[4,16,24], index: 1, kind: input, shape index: {}]
  %s2 = inlined_call_operand.hbm [shape: f32[16,32], index: 2, kind: input, shape index: {}]
  %s3 = inlined_call_operand.vmem [shape: f32[1,32], index: 3, kind: input, shape index: {}]
  %s4 = inlined_call_operand.hbm [shape: f32[24,32], index: 4, kind: input, shape index: {}]
  %s5 = inlined_call_operand.vmem [shape: f32[1,32], index: 5, kind: input, shape index: {}]
  %s6 = inlined_call_operand.hbm [shape: f32[24,32], index: 6, kind: input, shape index: {}]
  %s7 = inlined_call_operand.vmem [shape: f32[1,32], index: 7, kind: input, shape index: {}]
  %s8 = inlined_call_operand.hbm [shape: f32[32,32], index: 8, kind: input, shape index: {}]
  %s9 = inlined_call_operand.vmem [shape: f32[1,32], index: 9, kind: input, shape index: {}]
  %s10 = inlined_call_operand.hbm [shape: f32[4,8,32], index: 10, kind: output, shape index: {}]
  %s11 = sld [smem:[#allocation0]]
  $region97: #{tpu_custom_call.1} parent=0
    _
  %s13 = ssub.s32 1, %s11
  %s14 = scalar_select 0, %s13, %s11
  $region1: #{tpu_custom_call.1} parent=0
    #allocation2 [shape = 'u8[16384]{0}', space=vmem, size = 0x4000, scoped, tag = 'input window, operand 0']
    #allocation3 [shape = 's32[2]{0}', space=sflag, size = 0x8, scoped, tag = 'scoped memory for tpu_custom_call.1']
    #allocation4 [shape = 's32[2]{0}', space=sflag, size = 0x8, scoped, tag = 'scoped memory for tpu_custom_call.1']
    #allocation5 [shape = 'u8[32768]{0}', space=vmem, size = 0x8000, scoped, tag = 'input window, operand 1']
    #allocation6 [shape = 's32[2]{0}', space=sflag, size = 0x8, scoped, tag = 'scoped memory for tpu_custom_call.1']
    #allocation7 [shape = 'u8[8192]{0}', space=vmem, size = 0x2000, scoped, tag = 'input window, operand 2, single buffered']
    #allocation8 [shape = 'u8[12288]{0}', space=vmem, size = 0x3000, scoped, tag = 'input window, operand 4, single buffered']
    #allocation9 [shape = 's32[1]{0}', space=sflag, size = 0x4, scoped, tag = 'scoped memory for tpu_custom_call.1']
    #allocation10 [shape = 'u8[12288]{0}', space=vmem, size = 0x3000, scoped, tag = 'input window, operand 6, single buffered']
    #allocation11 [shape = 'u8[16384]{0}', space=vmem, size = 0x4000, scoped, tag = 'input window, operand 8, single buffered']
    #allocation12 [shape = 's32[1]{0}', space=sflag, size = 0x4, scoped, tag = 'scoped memory for tpu_custom_call.1']
    #allocation13 [shape = 'u8[16384]{0}', space=vmem, size = 0x4000, scoped, tag = 'output window, operand 0']
    %15 = vsyncpa [#allocation3], 0
    %s16 = scalar_lea.sflag [#allocation3], 1
    %17 = vsyncpa %s16, 0
    %18 = vsyncpa [#allocation6], 0
    %s19 = scalar_lea.sflag [#allocation6], 1
    %20 = vsyncpa %s19, 0
    %21 = vsyncpa [#allocation9], 0
    %22 = vsyncpa [#allocation12], 0
    %23 = vsyncpa [#allocation4], 0
    %s24 = scalar_lea.sflag [#allocation4], 1
    %25 = vsyncpa %s24, 0
    loop: start=0, step=1, limit=4
    $region2: #{tpu_custom_call.1} parent=1 // loop_pre_header
      _
    $region3: #{tpu_custom_call.1} parent=1 // loop_header
      %s27 = sphi 0, %s31
      %p28 = scmp.ge.s32.totalorder %s27, 4
      %s37 = sphi 0, %s39
      %s40 = sphi 0, %s37
      %s41 = sphi 0, %s40
      %s57 = sphi 0, %s41
      %s63 = sphi 0, %s65
      %s66 = sphi 0, %s63
      %s67 = sphi 0, %s66
      %s83 = sphi 0, %s67
      %s87 = sphi 0, %s87
      %s89 = sphi 0, %s87
      %s90 = sphi 0, %s89
      %s104 = sphi 0, %s90
      %s108 = sphi 0, %s108
      %s110 = sphi 0, %s108
      %s111 = sphi 0, %s110
      %s125 = sphi 0, %s111
      %s129 = sphi 0, %s129
      %s131 = sphi 0, %s129
      %s132 = sphi 0, %s131
      %s146 = sphi 0, %s132
      %s150 = sphi 0, %s150
      %s152 = sphi 0, %s150
      %s153 = sphi 0, %s152
      %s167 = sphi 0, %s153
      %s171 = sphi 0, %s171
      %s173 = sphi 0, %s171
      %s174 = sphi 0, %s173
      %s188 = sphi 0, %s174
      %s192 = sphi 0, %s192
      %s194 = sphi 0, %s192
      %s195 = sphi 0, %s194
      %s209 = sphi 0, %s195
      %s213 = sphi 0, %s213
      %s215 = sphi 0, %s213
      %s216 = sphi 0, %s215
      %s230 = sphi 0, %s216
      %s234 = sphi 0, %s234
      %s236 = sphi 0, %s234
      %s237 = sphi 0, %s236
      %s251 = sphi 0, %s237
      %s257 = sphi 0, %s259
      %s260 = sphi 0, %s257
      %s261 = sphi 0, %s260
      %s277 = sphi 0, %s261
    $region4: #{tpu_custom_call.1} parent=1 // loop_header_branch
      %30 = sbr.rel (%p28) target = $region8
    $region5: #{tpu_custom_call.1} parent=1 // loop_body
      %s32 = ssub.s32 %s27, 1
      %s33 = ssub.s32 %s27, 2
      %s34 = sadd.s32 %s27, 1
      %s35 = ssub.s32 %s27, %s34
      %p36 = scmp.eq.s32.totalorder %s35, 0
      %s38 = sadd.s32 %s37, 1
      %s39 = scalar_select %p36, %s37, %s38
      %p42 = pneg %p36
      %p43 = scmp.eq.s32.totalorder %s27, 1
      %p44 = por %p42, %p43
      %p45 = scmp.ne.s32.totalorder %s37, %s40
      %p46 = scmp.eq.s32.totalorder %s27, 0
      %p47 = por %p45, %p46
      %p48 = scmp.ne.s32.totalorder %s37, %s40
      %p49 = scmp.eq.s32.totalorder %s32, 1
      %p50 = por %p48, %p49
      %p51 = scmp.ne.s32.totalorder %s40, %s41
      %p52 = scmp.eq.s32.totalorder %s32, 0
      %p53 = por %p51, %p52
      %p54 = scmp.ne.s32.totalorder %s40, %s41
      %p55 = scmp.eq.s32.totalorder %s33, 1
      %p56 = por %p54, %p55
      %p58 = scmp.ne.s32.totalorder %s41, %s57
      %p59 = scmp.eq.s32.totalorder %s33, 0
      %p60 = por %p58, %p59
      %s61 = ssub.s32 %s27, %s34
      %p62 = scmp.eq.s32.totalorder %s61, 0
      %s64 = sadd.s32 %s63, 1
      %s65 = scalar_select %p62, %s63, %s64
      %p68 = pneg %p62
      %p69 = scmp.eq.s32.totalorder %s27, 1
      %p70 = por %p68, %p69
      %p71 = scmp.ne.s32.totalorder %s63, %s66
      %p72 = scmp.eq.s32.totalorder %s27, 0
      %p73 = por %p71, %p72
      %p74 = scmp.ne.s32.totalorder %s63, %s66
      %p75 = scmp.eq.s32.totalorder %s32, 1
      %p76 = por %p74, %p75
      %p77 = scmp.ne.s32.totalorder %s66, %s67
      %p78 = scmp.eq.s32.totalorder %s32, 0
      %p79 = por %p77, %p78
      %p80 = scmp.ne.s32.totalorder %s66, %s67
      %p81 = scmp.eq.s32.totalorder %s33, 1
      %p82 = por %p80, %p81
      %p84 = scmp.ne.s32.totalorder %s67, %s83
      %p85 = scmp.eq.s32.totalorder %s33, 0
      %p86 = por %p84, %p85
      %s88 = sadd.s32 %s87, 1
      %p91 = scmp.eq.s32.totalorder %s27, 1
      %p92 = scmp.ne.s32.totalorder %s87, %s89
      %p93 = scmp.eq.s32.totalorder %s27, 0
      %p94 = por %p92, %p93
      %p95 = scmp.ne.s32.totalorder %s87, %s89
      %p96 = scmp.eq.s32.totalorder %s32, 1
      %p97 = por %p95, %p96
      %p98 = scmp.ne.s32.totalorder %s89, %s90
      %p99 = scmp.eq.s32.totalorder %s32, 0
      %p100 = por %p98, %p99
      %p101 = scmp.ne.s32.totalorder %s89, %s90
      %p102 = scmp.eq.s32.totalorder %s33, 1
      %p103 = por %p101, %p102
      %p105 = scmp.ne.s32.totalorder %s90, %s104
      %p106 = scmp.eq.s32.totalorder %s33, 0
      %p107 = por %p105, %p106
      %s109 = sadd.s32 %s108, 1
      %p112 = scmp.eq.s32.totalorder %s27, 1
      %p113 = scmp.ne.s32.totalorder %s108, %s110
      %p114 = scmp.eq.s32.totalorder %s27, 0
      %p115 = por %p113, %p114
      %p116 = scmp.ne.s32.totalorder %s108, %s110
      %p117 = scmp.eq.s32.totalorder %s32, 1
      %p118 = por %p116, %p117
      %p119 = scmp.ne.s32.totalorder %s110, %s111
      %p120 = scmp.eq.s32.totalorder %s32, 0
      %p121 = por %p119, %p120
      %p122 = scmp.ne.s32.totalorder %s110, %s111
      %p123 = scmp.eq.s32.totalorder %s33, 1
      %p124 = por %p122, %p123
      %p126 = scmp.ne.s32.totalorder %s111, %s125
      %p127 = scmp.eq.s32.totalorder %s33, 0
      %p128 = por %p126, %p127
      %s130 = sadd.s32 %s129, 1
      %p133 = scmp.eq.s32.totalorder %s27, 1
      %p134 = scmp.ne.s32.totalorder %s129, %s131
      %p135 = scmp.eq.s32.totalorder %s27, 0
      %p136 = por %p134, %p135
      %p137 = scmp.ne.s32.totalorder %s129, %s131
      %p138 = scmp.eq.s32.totalorder %s32, 1
      %p139 = por %p137, %p138
      %p140 = scmp.ne.s32.totalorder %s131, %s132
      %p141 = scmp.eq.s32.totalorder %s32, 0
      %p142 = por %p140, %p141
      %p143 = scmp.ne.s32.totalorder %s131, %s132
      %p144 = scmp.eq.s32.totalorder %s33, 1
      %p145 = por %p143, %p144
      %p147 = scmp.ne.s32.totalorder %s132, %s146
      %p148 = scmp.eq.s32.totalorder %s33, 0
      %p149 = por %p147, %p148
      %s151 = sadd.s32 %s150, 1
      %p154 = scmp.eq.s32.totalorder %s27, 1
      %p155 = scmp.ne.s32.totalorder %s150, %s152
      %p156 = scmp.eq.s32.totalorder %s27, 0
      %p157 = por %p155, %p156
      %p158 = scmp.ne.s32.totalorder %s150, %s152
      %p159 = scmp.eq.s32.totalorder %s32, 1
      %p160 = por %p158, %p159
      %p161 = scmp.ne.s32.totalorder %s152, %s153
      %p162 = scmp.eq.s32.totalorder %s32, 0
      %p163 = por %p161, %p162
      %p164 = scmp.ne.s32.totalorder %s152, %s153
      %p165 = scmp.eq.s32.totalorder %s33, 1
      %p166 = por %p164, %p165
      %p168 = scmp.ne.s32.totalorder %s153, %s167
      %p169 = scmp.eq.s32.totalorder %s33, 0
      %p170 = por %p168, %p169
      %s172 = sadd.s32 %s171, 1
      %p175 = scmp.eq.s32.totalorder %s27, 1
      %p176 = scmp.ne.s32.totalorder %s171, %s173
      %p177 = scmp.eq.s32.totalorder %s27, 0
      %p178 = por %p176, %p177
      %p179 = scmp.ne.s32.totalorder %s171, %s173
      %p180 = scmp.eq.s32.totalorder %s32, 1
      %p181 = por %p179, %p180
      %p182 = scmp.ne.s32.totalorder %s173, %s174
      %p183 = scmp.eq.s32.totalorder %s32, 0
      %p184 = por %p182, %p183
      %p185 = scmp.ne.s32.totalorder %s173, %s174
      %p186 = scmp.eq.s32.totalorder %s33, 1
      %p187 = por %p185, %p186
      %p189 = scmp.ne.s32.totalorder %s174, %s188
      %p190 = scmp.eq.s32.totalorder %s33, 0
      %p191 = por %p189, %p190
      %s193 = sadd.s32 %s192, 1
      %p196 = scmp.eq.s32.totalorder %s27, 1
      %p197 = scmp.ne.s32.totalorder %s192, %s194
      %p198 = scmp.eq.s32.totalorder %s27, 0
      %p199 = por %p197, %p198
      %p200 = scmp.ne.s32.totalorder %s192, %s194
      %p201 = scmp.eq.s32.totalorder %s32, 1
      %p202 = por %p200, %p201
      %p203 = scmp.ne.s32.totalorder %s194, %s195
      %p204 = scmp.eq.s32.totalorder %s32, 0
      %p205 = por %p203, %p204
      %p206 = scmp.ne.s32.totalorder %s194, %s195
      %p207 = scmp.eq.s32.totalorder %s33, 1
      %p208 = por %p206, %p207
      %p210 = scmp.ne.s32.totalorder %s195, %s209
      %p211 = scmp.eq.s32.totalorder %s33, 0
      %p212 = por %p210, %p211
      %s214 = sadd.s32 %s213, 1
      %p217 = scmp.eq.s32.totalorder %s27, 1
      %p218 = scmp.ne.s32.totalorder %s213, %s215
      %p219 = scmp.eq.s32.totalorder %s27, 0
      %p220 = por %p218, %p219
      %p221 = scmp.ne.s32.totalorder %s213, %s215
      %p222 = scmp.eq.s32.totalorder %s32, 1
      %p223 = por %p221, %p222
      %p224 = scmp.ne.s32.totalorder %s215, %s216
      %p225 = scmp.eq.s32.totalorder %s32, 0
      %p226 = por %p224, %p225
      %p227 = scmp.ne.s32.totalorder %s215, %s216
      %p228 = scmp.eq.s32.totalorder %s33, 1
      %p229 = por %p227, %p228
      %p231 = scmp.ne.s32.totalorder %s216, %s230
      %p232 = scmp.eq.s32.totalorder %s33, 0
      %p233 = por %p231, %p232
      %s235 = sadd.s32 %s234, 1
      %p238 = scmp.eq.s32.totalorder %s27, 1
      %p239 = scmp.ne.s32.totalorder %s234, %s236
      %p240 = scmp.eq.s32.totalorder %s27, 0
      %p241 = por %p239, %p240
      %p242 = scmp.ne.s32.totalorder %s234, %s236
      %p243 = scmp.eq.s32.totalorder %s32, 1
      %p244 = por %p242, %p243
      %p245 = scmp.ne.s32.totalorder %s236, %s237
      %p246 = scmp.eq.s32.totalorder %s32, 0
      %p247 = por %p245, %p246
      %p248 = scmp.ne.s32.totalorder %s236, %s237
      %p249 = scmp.eq.s32.totalorder %s33, 1
      %p250 = por %p248, %p249
      %p252 = scmp.ne.s32.totalorder %s237, %s251
      %p253 = scmp.eq.s32.totalorder %s33, 0
      %p254 = por %p252, %p253
      %s255 = ssub.s32 %s27, %s34
      %p256 = scmp.eq.s32.totalorder %s255, 0
      %s258 = sadd.s32 %s257, 1
      %s259 = scalar_select %p256, %s257, %s258
      %p262 = pneg %p256
      %p263 = scmp.eq.s32.totalorder %s27, 1
      %p264 = por %p262, %p263
      %p265 = scmp.ne.s32.totalorder %s257, %s260
      %p266 = scmp.eq.s32.totalorder %s27, 0
      %p267 = por %p265, %p266
      %p268 = scmp.ne.s32.totalorder %s257, %s260
      %p269 = scmp.eq.s32.totalorder %s32, 1
      %p270 = por %p268, %p269
      %p271 = scmp.ne.s32.totalorder %s260, %s261
      %p272 = scmp.eq.s32.totalorder %s32, 0
      %p273 = por %p271, %p272
      %p274 = scmp.ne.s32.totalorder %s260, %s261
      %p275 = scmp.eq.s32.totalorder %s33, 1
      %p276 = por %p274, %p275
      %p278 = scmp.ne.s32.totalorder %s261, %s277
      %p279 = scmp.eq.s32.totalorder %s33, 0
      %p280 = por %p278, %p279
      %p281 = scmp.le.s32.totalorder 1, %s27
      %p282 = scmp.lt.s32.totalorder %s27, 3
      %p283 = pnand %p281, %p282
      %p284 = pneg %p283
      // Predicated region
      $region9: #{tpu_custom_call.1} parent=5 // pred_check
        _
      $region10: #{tpu_custom_call.1} parent=5 // pred_check_branch
        %286 = sbr.rel (%p283) target = $region12
      $region11: #{tpu_custom_call.1} parent=5 // pred_region
        %s287 = ssub.s32 %s27, 1
        // Predicated region
        $region13: #{tpu_custom_call.1} parent=11 // pred_check
          %p288 = pneg %p100
        $region14: #{tpu_custom_call.1} parent=11 // pred_check_branch
          %290 = sbr.rel (%p288) target = $region16
        $region15: #{tpu_custom_call.1} parent=11 // pred_region
          %292 = vsyncadd [#allocation6], 0
          %s293 = sshll.u32 %s2, 4
          %s294 = int_to_ptr.hbm [resolvable:$true] %s293
          %s295 = sshll.u32 [#allocation7], 4
          %s296 = int_to_ptr.vmem [resolvable:$true] %s295
          %301 = dma.hbm_to_vmem [thread:$0]  %s294, 256, %s296, [#allocation6], 128, 128, 8
        $region16: #{tpu_custom_call.1} parent=11 // pred_fallthru
          _
        // Predicated region
        $region17: #{tpu_custom_call.1} parent=11 // pred_check
          %p302 = pneg %p121
        $region18: #{tpu_custom_call.1} parent=11 // pred_check_branch
          %304 = sbr.rel (%p302) target = $region20
        $region19: #{tpu_custom_call.1} parent=11 // pred_region
          _
        $region20: #{tpu_custom_call.1} parent=11 // pred_fallthru
          _
        // Predicated region
        $region21: #{tpu_custom_call.1} parent=11 // pred_check
          %p305 = pneg %p142
        $region22: #{tpu_custom_call.1} parent=11 // pred_check_branch
          %307 = sbr.rel (%p305) target = $region24
        $region23: #{tpu_custom_call.1} parent=11 // pred_region
          %309 = vsyncadd [#allocation9], 0
          %s310 = sshll.u32 %s4, 4
          %s311 = int_to_ptr.hbm [resolvable:$true] %s310
          %s312 = sshll.u32 [#allocation8], 4
          %s313 = int_to_ptr.vmem [resolvable:$true] %s312
          %318 = dma.hbm_to_vmem [thread:$0]  %s311, 384, %s313, [#allocation9], 128, 128, 8
        $region24: #{tpu_custom_call.1} parent=11 // pred_fallthru
          _
        // Predicated region
        $region25: #{tpu_custom_call.1} parent=11 // pred_check
          %p319 = pneg %p163
        $region26: #{tpu_custom_call.1} parent=11 // pred_check_branch
          %321 = sbr.rel (%p319) target = $region28
        $region27: #{tpu_custom_call.1} parent=11 // pred_region
          _
        $region28: #{tpu_custom_call.1} parent=11 // pred_fallthru
          _
        // Predicated region
        $region29: #{tpu_custom_call.1} parent=11 // pred_check
          %p322 = pneg %p184
        $region30: #{tpu_custom_call.1} parent=11 // pred_check_branch
          %324 = sbr.rel (%p322) target = $region32
        $region31: #{tpu_custom_call.1} parent=11 // pred_region
          %326 = vsyncadd [#allocation9], 0
          %s327 = sshll.u32 %s6, 4
          %s328 = int_to_ptr.hbm [resolvable:$true] %s327
          %s329 = sshll.u32 [#allocation10], 4
          %s330 = int_to_ptr.vmem [resolvable:$true] %s329
          %335 = dma.hbm_to_vmem [thread:$0]  %s328, 384, %s330, [#allocation9], 128, 128, 8
        $region32: #{tpu_custom_call.1} parent=11 // pred_fallthru
          _
        // Predicated region
        $region33: #{tpu_custom_call.1} parent=11 // pred_check
          %p336 = pneg %p205
        $region34: #{tpu_custom_call.1} parent=11 // pred_check_branch
          %338 = sbr.rel (%p336) target = $region36
        $region35: #{tpu_custom_call.1} parent=11 // pred_region
          _
        $region36: #{tpu_custom_call.1} parent=11 // pred_fallthru
          _
        // Predicated region
        $region37: #{tpu_custom_call.1} parent=11 // pred_check
          %p339 = pneg %p226
        $region38: #{tpu_custom_call.1} parent=11 // pred_check_branch
          %341 = sbr.rel (%p339) target = $region40
        $region39: #{tpu_custom_call.1} parent=11 // pred_region
          %343 = vsyncadd [#allocation12], 0
          %s344 = sshll.u32 %s8, 4
          %s345 = int_to_ptr.hbm [resolvable:$true] %s344
          %s346 = sshll.u32 [#allocation11], 4
          %s347 = int_to_ptr.vmem [resolvable:$true] %s346
          %352 = dma.hbm_to_vmem [thread:$0]  %s345, 512, %s347, [#allocation12], 128, 128, 8
        $region40: #{tpu_custom_call.1} parent=11 // pred_fallthru
          _
        // Predicated region
        $region41: #{tpu_custom_call.1} parent=11 // pred_check
          %p353 = pneg %p247
        $region42: #{tpu_custom_call.1} parent=11 // pred_check_branch
          %355 = sbr.rel (%p353) target = $region44
        $region43: #{tpu_custom_call.1} parent=11 // pred_region
          _
        $region44: #{tpu_custom_call.1} parent=11 // pred_fallthru
          _
      $region12: #{tpu_custom_call.1} parent=5 // pred_fallthru
        _
      %p356 = scmp.lt.s32.totalorder %s27, 2
      // Predicated region
      $region45: #{tpu_custom_call.1} parent=5 // pred_check
        %p357 = pneg %p356
      $region46: #{tpu_custom_call.1} parent=5 // pred_check_branch
        %359 = sbr.rel (%p357) target = $region48
      $region47: #{tpu_custom_call.1} parent=5 // pred_region
        // Predicated region
        $region49: #{tpu_custom_call.1} parent=47 // pred_check
          %p360 = pneg %p47
        $region50: #{tpu_custom_call.1} parent=47 // pred_check_branch
          %362 = sbr.rel (%p360) target = $region52
        $region51: #{tpu_custom_call.1} parent=47 // pred_region
          %s363 = sand.u32 %s37, 1
          %s364 = scalar_lea.sflag [#allocation3], %s363
          %s365 = sand.u32 %s37, 1
          %s366 = smul.addr %s365, 16
          %s367 = scalar_lea.vmem [#allocation2], %s366
          %s368 = smul.u32 2, %s27
          %370 = vsyncadd %s364, 0
          %s371 = smul.addr %s368, 8
          %s372 = scalar_lea.hbm %s0, %s371
          %s373 = sshll.u32 %s372, 4
          %s374 = int_to_ptr.hbm [resolvable:$true] %s373
          %s375 = sshll.u32 %s367, 4
          %s376 = int_to_ptr.vmem [resolvable:$true] %s375
          %381 = dma.hbm_to_vmem [thread:$0]  %s374, 256, %s376, %s364, 128, 128, 8
        $region52: #{tpu_custom_call.1} parent=47 // pred_fallthru
          _
        // Predicated region
        $region53: #{tpu_custom_call.1} parent=47 // pred_check
          %p382 = pneg %p73
        $region54: #{tpu_custom_call.1} parent=47 // pred_check_branch
          %384 = sbr.rel (%p382) target = $region56
        $region55: #{tpu_custom_call.1} parent=47 // pred_region
          %s385 = sand.u32 %s27, 1
          %s386 = scalar_lea.sflag [#allocation6], %s385
          %s387 = sand.u32 %s63, 1
          %s388 = smul.addr %s387, 32
          %s389 = scalar_lea.vmem [#allocation5], %s388
          %s390 = smul.u32 2, %s27
          %392 = vsyncadd %s386, 0
          %s393 = smul.addr %s390, 2
          %s394 = smul.addr %s393, 8
          %s395 = scalar_lea.hbm %s1, %s394
          %s396 = sshll.u32 %s395, 4
          %s397 = int_to_ptr.hbm [resolvable:$true] %s396
          %s398 = sshll.u32 %s389, 4
          %s399 = int_to_ptr.vmem [resolvable:$true] %s398
          %404 = dma.hbm_to_vmem [thread:$0]  %s397, 512, %s399, %s386, 128, 128, 8
        $region56: #{tpu_custom_call.1} parent=47 // pred_fallthru
          _
      $region48: #{tpu_custom_call.1} parent=5 // pred_fallthru
        _
      %p405 = scmp.le.s32.totalorder 1, %s27
      %p406 = scmp.lt.s32.totalorder %s27, 3
      %p407 = pnand %p405, %p406
      %p408 = pneg %p407
      // Predicated region
      $region57: #{tpu_custom_call.1} parent=5 // pred_check
        _
      $region58: #{tpu_custom_call.1} parent=5 // pred_check_branch
        %410 = sbr.rel (%p407) target = $region60
      $region59: #{tpu_custom_call.1} parent=5 // pred_region
        %s411 = ssub.s32 %s27, 1
        %s412 = sand.u32 %s40, 1
        %s413 = scalar_lea.sflag [#allocation3], %s412
        %s414 = sand.u32 %s40, 1
        %s415 = smul.addr %s414, 16
        %s416 = scalar_lea.vmem [#allocation2], %s415
        // Predicated region
        $region61: #{tpu_custom_call.1} parent=59 // pred_check
          %p417 = pneg %p53
        $region62: #{tpu_custom_call.1} parent=59 // pred_check_branch
          %419 = sbr.rel (%p417) target = $region64
        $region63: #{tpu_custom_call.1} parent=59 // pred_region
          %421 = dma.done %s413, 256
        $region64: #{tpu_custom_call.1} parent=59 // pred_fallthru
          _
        %s422 = sand.u32 %s32, 1
        %s423 = scalar_lea.sflag [#allocation6], %s422
        %s424 = sand.u32 %s66, 1
        %s425 = smul.addr %s424, 32
        %s426 = scalar_lea.vmem [#allocation5], %s425
        // Predicated region
        $region65: #{tpu_custom_call.1} parent=59 // pred_check
          %p427 = pneg %p79
        $region66: #{tpu_custom_call.1} parent=59 // pred_check_branch
          %429 = sbr.rel (%p427) target = $region68
        $region67: #{tpu_custom_call.1} parent=59 // pred_region
          %431 = dma.done %s423, 512
        $region68: #{tpu_custom_call.1} parent=59 // pred_fallthru
          _
        // Predicated region
        $region69: #{tpu_custom_call.1} parent=59 // pred_check
          %p432 = pneg %p100
        $region70: #{tpu_custom_call.1} parent=59 // pred_check_branch
          %434 = sbr.rel (%p432) target = $region72
        $region71: #{tpu_custom_call.1} parent=59 // pred_region
          %436 = dma.done [#allocation6], 256
        $region72: #{tpu_custom_call.1} parent=59 // pred_fallthru
          _
        // Predicated region
        $region73: #{tpu_custom_call.1} parent=59 // pred_check
          %p437 = pneg %p142
        $region74: #{tpu_custom_call.1} parent=59 // pred_check_branch
          %439 = sbr.rel (%p437) target = $region76
        $region75: #{tpu_custom_call.1} parent=59 // pred_region
          %441 = dma.done [#allocation9], 384
        $region76: #{tpu_custom_call.1} parent=59 // pred_fallthru
          _
        // Predicated region
        $region77: #{tpu_custom_call.1} parent=59 // pred_check
          %p442 = pneg %p184
        $region78: #{tpu_custom_call.1} parent=59 // pred_check_branch
          %444 = sbr.rel (%p442) target = $region80
        $region79: #{tpu_custom_call.1} parent=59 // pred_region
          %446 = dma.done [#allocation9], 384
        $region80: #{tpu_custom_call.1} parent=59 // pred_fallthru
          _
        // Predicated region
        $region81: #{tpu_custom_call.1} parent=59 // pred_check
          %p447 = pneg %p226
        $region82: #{tpu_custom_call.1} parent=59 // pred_check_branch
          %449 = sbr.rel (%p447) target = $region84
        $region83: #{tpu_custom_call.1} parent=59 // pred_region
          %451 = dma.done [#allocation12], 512
        $region84: #{tpu_custom_call.1} parent=59 // pred_fallthru
          _
        %s452 = sand.u32 %s40, 1
        %s453 = scalar_lea.sflag [#allocation3], %s452
        %s454 = sand.u32 %s40, 1
        %s455 = smul.addr %s454, 16
        %s456 = scalar_lea.vmem [#allocation2], %s455
        %p457 = pneg %p53
        %p458 = pneg %p50
        %s459 = sand.u32 %s32, 1
        %s460 = scalar_lea.sflag [#allocation6], %s459
        %s461 = sand.u32 %s66, 1
        %s462 = smul.addr %s461, 32
        %s463 = scalar_lea.vmem [#allocation5], %s462
        %p464 = pneg %p79
        %p465 = pneg %p76
        %p466 = pneg %p100
        %p467 = pneg %p97
        %p468 = pneg %p121
        %p469 = pneg %p118
        %p470 = pneg %p142
        %p471 = pneg %p139
        %p472 = pneg %p163
        %p473 = pneg %p160
        %p474 = pneg %p184
        %p475 = pneg %p181
        %p476 = pneg %p205
        %p477 = pneg %p202
        %p478 = pneg %p226
        %p479 = pneg %p223
        %p480 = pneg %p247
        %p481 = pneg %p244
        %p482 = pneg %p273
        %p483 = pneg %p270
        %s484 = sand.u32 %s260, 1
        %s485 = scalar_lea.sflag [#allocation4], %s484
        %s486 = sand.u32 %s260, 1
        %s487 = smul.addr %s486, 16
        %s488 = scalar_lea.vmem [#allocation13], %s487
        %s489 = smul.u32 2, %s32
        %s490 = smul.u32 2, %s32
        %s491 = smul.u32 2, %s32
        %v492 = vld [vmem:[%s416] sm:$0xff]
        %v493 = vld [vmem:[%s416 + $0x8] sm:$0xff]
        %v494 = vld [vmem:[%s426] sm:$0xff]
        %v495 = vld [vmem:[%s426 + $0x8] sm:$0xff]
        %v496 = vld [vmem:[%s426 + $0x10] sm:$0xff]
        %v497 = vld [vmem:[%s426 + $0x18] sm:$0xff]
        %v498 = vld [vmem:[#allocation7] sm:$0xff]
        %v499 = vld [vmem:[#allocation7 + $0x8] sm:$0xff]
        %v500 = vld [vmem:[%s3] sm:$0x1]
        %v502 = vperm.slane %v500, 0
        %vm504 = vcmask 130048
        %v506 = vsel %vm504, %v492, 0
        %v509 = vsel %vm504, %v493, 0
        %511 = vmatpush.msra.mxu0 0.0
        %512 = vmatpush.msra.mxu0 0.0
        %513 = vmatpush.msra.mxu0 0.0
        %514 = vmatpush.msra.mxu0 0.0
        %515 = vmatpush.msra.mxu0 0.0
        %516 = vmatpush.msra.mxu0 0.0
        %517 = vmatpush.msra.mxu0 0.0
        %518 = vmatpush.msra.mxu0 0.0
        %519 = vmatpush.msra.mxu0 0.0
        %520 = vmatpush.msra.mxu0 0.0
        %521 = vmatpush.msra.mxu0 0.0
        %522 = vmatpush.msra.mxu0 0.0
        %523 = vmatpush.msra.mxu0 0.0
        %524 = vmatpush.msra.mxu0 0.0
        %525 = vmatpush.msra.mxu0 %v499
        %526 = vmatpush.msra.mxu0 %v498
        %527 = vmatmul.f32.gmra.mxu0 %v506
        %v528 = vpop.f32.mrf.mxu0
        %v529 = vadd.f32 %v502, %v528
        %530 = vmatmul.f32.gmra.mxu0 %v509
        %v531 = vpop.f32.mrf.mxu0
        %v532 = vadd.f32 %v502, %v531
        %533 = vdwg.mxu0
        %v534 = vld [vmem:[#allocation8] sm:$0xff]
        %v535 = vld [vmem:[#allocation8 + $0x8] sm:$0xff]
        %v536 = vld [vmem:[#allocation8 + $0x10] sm:$0xff]
        %v537 = vld [vmem:[%s5] sm:$0x1]
        %v539 = vperm.slane %v537, 0
        %vm541 = vcmask 195584
        %v543 = vsel %vm541, %v494, 0
        %v546 = vsel %vm541, %v495, 0
        %v549 = vsel %vm541, %v496, 0
        %v552 = vsel %vm541, %v497, 0
        %554 = vmatpush.msra.mxu0 0.0
        %555 = vmatpush.msra.mxu0 0.0
        %556 = vmatpush.msra.mxu0 0.0
        %557 = vmatpush.msra.mxu0 0.0
        %558 = vmatpush.msra.mxu0 0.0
        %559 = vmatpush.msra.mxu0 0.0
        %560 = vmatpush.msra.mxu0 0.0
        %561 = vmatpush.msra.mxu0 0.0
        %562 = vmatpush.msra.mxu0 0.0
        %563 = vmatpush.msra.mxu0 0.0
        %564 = vmatpush.msra.mxu0 0.0
        %565 = vmatpush.msra.mxu0 0.0
        %566 = vmatpush.msra.mxu0 0.0
        %567 = vmatpush.msra.mxu0 %v536
        %568 = vmatpush.msra.mxu0 %v535
        %569 = vmatpush.msra.mxu0 %v534
        %570 = vmatmul.f32.gmra.mxu0 %v543
        %v571 = vpop.f32.mrf.mxu0
        %v572 = vadd.f32 %v539, %v571
        %573 = vmatmul.f32.gmra.mxu0 %v546
        %v574 = vpop.f32.mrf.mxu0
        %v575 = vadd.f32 %v539, %v574
        %576 = vmatmul.f32.gmra.mxu0 %v549
        %v577 = vpop.f32.mrf.mxu0
        %v578 = vadd.f32 %v539, %v577
        %579 = vmatmul.f32.gmra.mxu0 %v552
        %v580 = vpop.f32.mrf.mxu0
        %v581 = vadd.f32 %v539, %v580
        %582 = vdwg.mxu0
        %v583 = vld [vmem:[#allocation10] sm:$0xff]
        %v584 = vld [vmem:[#allocation10 + $0x8] sm:$0xff]
        %v585 = vld [vmem:[#allocation10 + $0x10] sm:$0xff]
        %v586 = vld [vmem:[%s7] sm:$0x1]
        %v588 = vperm.slane %v586, 0
        %590 = vmatpush.msra.mxu0 0.0
        %591 = vmatpush.msra.mxu0 0.0
        %592 = vmatpush.msra.mxu0 0.0
        %593 = vmatpush.msra.mxu0 0.0
        %594 = vmatpush.msra.mxu0 0.0
        %595 = vmatpush.msra.mxu0 0.0
        %596 = vmatpush.msra.mxu0 0.0
        %597 = vmatpush.msra.mxu0 0.0
        %598 = vmatpush.msra.mxu0 0.0
        %599 = vmatpush.msra.mxu0 0.0
        %600 = vmatpush.msra.mxu0 0.0
        %601 = vmatpush.msra.mxu0 0.0
        %602 = vmatpush.msra.mxu0 0.0
        %603 = vmatpush.msra.mxu0 %v585
        %604 = vmatpush.msra.mxu0 %v584
        %605 = vmatpush.msra.mxu0 %v583
        %606 = vmatmul.f32.gmra.mxu0 %v543
        %v607 = vpop.f32.mrf.mxu0
        %v608 = vadd.f32 %v588, %v607
        %609 = vmatmul.f32.gmra.mxu0 %v546
        %v610 = vpop.f32.mrf.mxu0
        %v611 = vadd.f32 %v588, %v610
        %612 = vmatmul.f32.gmra.mxu0 %v549
        %v613 = vpop.f32.mrf.mxu0
        %v614 = vadd.f32 %v588, %v613
        %615 = vmatmul.f32.gmra.mxu0 %v552
        %v616 = vpop.f32.mrf.mxu0
        %v617 = vadd.f32 %v588, %v616
        %618 = vdwg.mxu0
        %v619 = vmul.f32 %v529, 0.17677669
        %v620 = vmul.f32 %v532, 0.17677669
        %vm621 = vcmask 64512
        %v623 = vsel %vm621, %v619, 0
        %v626 = vsel %vm621, %v572, 0
        %v629 = vsel %vm621, %v575, 0
        %631 = vmatpush.xpose.msra.mxu0 0.0
        %632 = vmatpush.xpose.msra.mxu0 0.0
        %633 = vmatpush.xpose.msra.mxu0 0.0
        %634 = vmatpush.xpose.msra.mxu0 0.0
        %635 = vmatpush.xpose.msra.mxu0 0.0
        %636 = vmatpush.xpose.msra.mxu0 0.0
        %637 = vmatpush.xpose.msra.mxu0 0.0
        %638 = vmatpush.xpose.msra.mxu0 0.0
        %639 = vmatpush.xpose.msra.mxu0 0.0
        %640 = vmatpush.xpose.msra.mxu0 0.0
        %641 = vmatpush.xpose.msra.mxu0 0.0
        %642 = vmatpush.xpose.msra.mxu0 0.0
        %643 = vmatpush.xpose.msra.mxu0 0.0
        %644 = vmatpush.xpose.msra.mxu0 0.0
        %645 = vmatpush.xpose.msra.mxu0 %v629
        %646 = vmatpush.xpose.msra.mxu0 %v626
        %647 = vmatmul.f32.gmra.mxu0 %v623
        %v648 = vpop.f32.mrf.mxu0
        %v649 = vadd.f32 0.0, %v648
        %650 = vdwg.mxu0
        %v652 = vsel %vm621, %v620, 0
        %v655 = vsel %vm621, %v578, 0
        %v658 = vsel %vm621, %v581, 0
        %660 = vmatpush.xpose.msra.mxu0 0.0
        %661 = vmatpush.xpose.msra.mxu0 0.0
        %662 = vmatpush.xpose.msra.mxu0 0.0
        %663 = vmatpush.xpose.msra.mxu0 0.0
        %664 = vmatpush.xpose.msra.mxu0 0.0
        %665 = vmatpush.xpose.msra.mxu0 0.0
        %666 = vmatpush.xpose.msra.mxu0 0.0
        %667 = vmatpush.xpose.msra.mxu0 0.0
        %668 = vmatpush.xpose.msra.mxu0 0.0
        %669 = vmatpush.xpose.msra.mxu0 0.0
        %670 = vmatpush.xpose.msra.mxu0 0.0
        %671 = vmatpush.xpose.msra.mxu0 0.0
        %672 = vmatpush.xpose.msra.mxu0 0.0
        %673 = vmatpush.xpose.msra.mxu0 0.0
        %674 = vmatpush.xpose.msra.mxu0 %v658
        %675 = vmatpush.xpose.msra.mxu0 %v655
        %676 = vmatmul.f32.gmra.mxu0 %v652
        %v677 = vpop.f32.mrf.mxu0
        %v678 = vadd.f32 0.0, %v677
        %679 = vdwg.mxu0
        %v680 = vsel %vm504, %v649, -inf
        %681 = vmax.xlane.f32.xlu0 %v680
        %v682 = vpop.xlane.xlu0 %681
        %v683 = vsel %vm504, %v678, -inf
        %684 = vmax.xlane.f32.xlu0 %v683
        %v685 = vpop.xlane.xlu0 %684
        %v686 = vsub.f32 %v649, %v682
        %v687 = vsub.f32 %v678, %v685
        %v688 = vmul.f32 %v686, 1.442695
        %v689 = vpow.pop %v688
        %v690 = vmul.f32 %v687, 1.442695
        %v691 = vpow.pop %v690
        %v692 = vsel %vm504, %v689, 0.0
        %693 = vadd.xlane.f32.xlu0 %v692
        %v694 = vpop.xlane.xlu0 %693
        %v695 = vsel %vm504, %v691, 0.0
        %696 = vadd.xlane.f32.xlu0 %v695
        %v697 = vpop.xlane.xlu0 %696
        %v698 = vrcp.pop %v694
        %v699 = vrcp.pop %v697
        %v700 = vmul.f32 %v689, %v698
        %v701 = vmul.f32 %v691, %v699
        %v703 = vsel %vm504, %v700, 0
        %705 = vmatpush.msra.mxu0 0.0
        %706 = vmatpush.msra.mxu0 0.0
        %707 = vmatpush.msra.mxu0 0.0
        %708 = vmatpush.msra.mxu0 0.0
        %709 = vmatpush.msra.mxu0 0.0
        %710 = vmatpush.msra.mxu0 0.0
        %711 = vmatpush.msra.mxu0 0.0
        %712 = vmatpush.msra.mxu0 0.0
        %713 = vmatpush.msra.mxu0 0.0
        %714 = vmatpush.msra.mxu0 0.0
        %715 = vmatpush.msra.mxu0 0.0
        %716 = vmatpush.msra.mxu0 0.0
        %717 = vmatpush.msra.mxu0 0.0
        %718 = vmatpush.msra.mxu0 0.0
        %719 = vmatpush.msra.mxu0 %v611
        %720 = vmatpush.msra.mxu0 %v608
        %721 = vmatmul.f32.gmra.mxu0 %v703
        %v722 = vpop.f32.mrf.mxu0
        %v723 = vadd.f32 0.0, %v722
        %724 = vdwg.mxu0
        %v726 = vsel %vm504, %v701, 0
        %728 = vmatpush.msra.mxu0 0.0
        %729 = vmatpush.msra.mxu0 0.0
        %730 = vmatpush.msra.mxu0 0.0
        %731 = vmatpush.msra.mxu0 0.0
        %732 = vmatpush.msra.mxu0 0.0
        %733 = vmatpush.msra.mxu0 0.0
        %734 = vmatpush.msra.mxu0 0.0
        %735 = vmatpush.msra.mxu0 0.0
        %736 = vmatpush.msra.mxu0 0.0
        %737 = vmatpush.msra.mxu0 0.0
        %738 = vmatpush.msra.mxu0 0.0
        %739 = vmatpush.msra.mxu0 0.0
        %740 = vmatpush.msra.mxu0 0.0
        %741 = vmatpush.msra.mxu0 0.0
        %742 = vmatpush.msra.mxu0 %v617
        %743 = vmatpush.msra.mxu0 %v614
        %744 = vmatmul.f32.gmra.mxu0 %v726
        %v745 = vpop.f32.mrf.mxu0
        %v746 = vadd.f32 0.0, %v745
        %747 = vdwg.mxu0
        %v748 = vadd.f32 %v529, %v723
        %v749 = vadd.f32 %v532, %v746
        %750 = vrot.lane.b32.xlu0 %v619, 120
        %v751 = vpop.permute.xlu0 %750
        %752 = vrot.lane.b32.xlu0 %v572, 120
        %v753 = vpop.permute.xlu0 %752
        %754 = vrot.lane.b32.xlu0 %v575, 120
        %v755 = vpop.permute.xlu0 %754
        %v756 = vsel %vm621, %v751, 0
        %v758 = vsel %vm621, %v753, 0
        %v760 = vsel %vm621, %v755, 0
        %762 = vmatpush.xpose.msra.mxu0 0.0
        %763 = vmatpush.xpose.msra.mxu0 0.0
        %764 = vmatpush.xpose.msra.mxu0 0.0
        %765 = vmatpush.xpose.msra.mxu0 0.0
        %766 = vmatpush.xpose.msra.mxu0 0.0
        %767 = vmatpush.xpose.msra.mxu0 0.0
        %768 = vmatpush.xpose.msra.mxu0 0.0
        %769 = vmatpush.xpose.msra.mxu0 0.0
        %770 = vmatpush.xpose.msra.mxu0 0.0
        %771 = vmatpush.xpose.msra.mxu0 0.0
        %772 = vmatpush.xpose.msra.mxu0 0.0
        %773 = vmatpush.xpose.msra.mxu0 0.0
        %774 = vmatpush.xpose.msra.mxu0 0.0
        %775 = vmatpush.xpose.msra.mxu0 0.0
        %776 = vmatpush.xpose.msra.mxu0 %v760
        %777 = vmatpush.xpose.msra.mxu0 %v758
        %778 = vmatmul.f32.gmra.mxu0 %v756
        %v779 = vpop.f32.mrf.mxu0
        %v780 = vadd.f32 0.0, %v779
        %781 = vdwg.mxu0
        %782 = vrot.lane.b32.xlu0 %v620, 120
        %v783 = vpop.permute.xlu0 %782
        %784 = vrot.lane.b32.xlu0 %v578, 120
        %v785 = vpop.permute.xlu0 %784
        %786 = vrot.lane.b32.xlu0 %v581, 120
        %v787 = vpop.permute.xlu0 %786
        %v788 = vsel %vm621, %v783, 0
        %v790 = vsel %vm621, %v785, 0
        %v792 = vsel %vm621, %v787, 0
        %794 = vmatpush.xpose.msra.mxu0 0.0
        %795 = vmatpush.xpose.msra.mxu0 0.0
        %796 = vmatpush.xpose.msra.mxu0 0.0
        %797 = vmatpush.xpose.msra.mxu0 0.0
        %798 = vmatpush.xpose.msra.mxu0 0.0
        %799 = vmatpush.xpose.msra.mxu0 0.0
        %800 = vmatpush.xpose.msra.mxu0 0.0
        %801 = vmatpush.xpose.msra.mxu0 0.0
        %802 = vmatpush.xpose.msra.mxu0 0.0
        %803 = vmatpush.xpose.msra.mxu0 0.0
        %804 = vmatpush.xpose.msra.mxu0 0.0
        %805 = vmatpush.xpose.msra.mxu0 0.0
        %806 = vmatpush.xpose.msra.mxu0 0.0
        %807 = vmatpush.xpose.msra.mxu0 0.0
        %808 = vmatpush.xpose.msra.mxu0 %v792
        %809 = vmatpush.xpose.msra.mxu0 %v790
        %810 = vmatmul.f32.gmra.mxu0 %v788
        %v811 = vpop.f32.mrf.mxu0
        %v812 = vadd.f32 0.0, %v811
        %813 = vdwg.mxu0
        %v814 = vsel %vm504, %v780, -inf
        %815 = vmax.xlane.f32.xlu0 %v814
        %v816 = vpop.xlane.xlu0 %815
        %v817 = vsel %vm504, %v812, -inf
        %818 = vmax.xlane.f32.xlu0 %v817
        %v819 = vpop.xlane.xlu0 %818
        %v820 = vsub.f32 %v780, %v816
        %v821 = vsub.f32 %v812, %v819
        %v822 = vmul.f32 %v820, 1.442695
        %v823 = vpow.pop %v822
        %v824 = vmul.f32 %v821, 1.442695
        %v825 = vpow.pop %v824
        %v826 = vsel %vm504, %v823, 0.0
        %827 = vadd.xlane.f32.xlu0 %v826
        %v828 = vpop.xlane.xlu0 %827
        %v829 = vsel %vm504, %v825, 0.0
        %830 = vadd.xlane.f32.xlu0 %v829
        %v831 = vpop.xlane.xlu0 %830
        %v832 = vrcp.pop %v828
        %v833 = vrcp.pop %v831
        %v834 = vmul.f32 %v823, %v832
        %v835 = vmul.f32 %v825, %v833
        %838 = vrot.lane.b32.xlu0 %v608, 120
        %v839 = vpop.permute.xlu0 %838
        %840 = vrot.lane.b32.xlu0 %v611, 120
        %v841 = vpop.permute.xlu0 %840
        %v845 = vsel %vm504, %v834, 0
        %847 = vmatpush.msra.mxu0 0.0
        %848 = vmatpush.msra.mxu0 0.0
        %849 = vmatpush.msra.mxu0 0.0
        %850 = vmatpush.msra.mxu0 0.0
        %851 = vmatpush.msra.mxu0 0.0
        %852 = vmatpush.msra.mxu0 0.0
        %853 = vmatpush.msra.mxu0 0.0
        %854 = vmatpush.msra.mxu0 0.0
        %855 = vmatpush.msra.mxu0 0.0
        %856 = vmatpush.msra.mxu0 0.0
        %857 = vmatpush.msra.mxu0 0.0
        %858 = vmatpush.msra.mxu0 0.0
        %859 = vmatpush.msra.mxu0 0.0
        %860 = vmatpush.msra.mxu0 0.0
        %861 = vmatpush.msra.mxu0 %v841
        %862 = vmatpush.msra.mxu0 %v839
        %863 = vmatmul.f32.gmra.mxu0 %v845
        %v864 = vpop.f32.mrf.mxu0
        %v865 = vadd.f32 0.0, %v864
        %866 = vdwg.mxu0
        %869 = vrot.lane.b32.xlu0 %v614, 120
        %v870 = vpop.permute.xlu0 %869
        %871 = vrot.lane.b32.xlu0 %v617, 120
        %v872 = vpop.permute.xlu0 %871
        %v876 = vsel %vm504, %v835, 0
        %878 = vmatpush.msra.mxu0 0.0
        %879 = vmatpush.msra.mxu0 0.0
        %880 = vmatpush.msra.mxu0 0.0
        %881 = vmatpush.msra.mxu0 0.0
        %882 = vmatpush.msra.mxu0 0.0
        %883 = vmatpush.msra.mxu0 0.0
        %884 = vmatpush.msra.mxu0 0.0
        %885 = vmatpush.msra.mxu0 0.0
        %886 = vmatpush.msra.mxu0 0.0
        %887 = vmatpush.msra.mxu0 0.0
        %888 = vmatpush.msra.mxu0 0.0
        %889 = vmatpush.msra.mxu0 0.0
        %890 = vmatpush.msra.mxu0 0.0
        %891 = vmatpush.msra.mxu0 0.0
        %892 = vmatpush.msra.mxu0 %v872
        %893 = vmatpush.msra.mxu0 %v870
        %894 = vmatmul.f32.gmra.mxu0 %v876
        %v895 = vpop.f32.mrf.mxu0
        %v896 = vadd.f32 0.0, %v895
        %897 = vdwg.mxu0
        %900 = vrot.lane.b32.xlu0 %v865, 8
        %v901 = vpop.permute.xlu0 %900
        %902 = vrot.lane.b32.xlu0 %v896, 8
        %v903 = vpop.permute.xlu0 %902
        %v906 = vadd.f32 %v529, %v901
        %v907 = vadd.f32 %v532, %v903
        %908 = vrot.lane.b32.xlu0 %v619, 112
        %v909 = vpop.permute.xlu0 %908
        %910 = vrot.lane.b32.xlu0 %v572, 112
        %v911 = vpop.permute.xlu0 %910
        %912 = vrot.lane.b32.xlu0 %v575, 112
        %v913 = vpop.permute.xlu0 %912
        %v914 = vsel %vm621, %v909, 0
        %v916 = vsel %vm621, %v911, 0
        %v918 = vsel %vm621, %v913, 0
        %920 = vmatpush.xpose.msra.mxu0 0.0
        %921 = vmatpush.xpose.msra.mxu0 0.0
        %922 = vmatpush.xpose.msra.mxu0 0.0
        %923 = vmatpush.xpose.msra.mxu0 0.0
        %924 = vmatpush.xpose.msra.mxu0 0.0
        %925 = vmatpush.xpose.msra.mxu0 0.0
        %926 = vmatpush.xpose.msra.mxu0 0.0
        %927 = vmatpush.xpose.msra.mxu0 0.0
        %928 = vmatpush.xpose.msra.mxu0 0.0
        %929 = vmatpush.xpose.msra.mxu0 0.0
        %930 = vmatpush.xpose.msra.mxu0 0.0
        %931 = vmatpush.xpose.msra.mxu0 0.0
        %932 = vmatpush.xpose.msra.mxu0 0.0
        %933 = vmatpush.xpose.msra.mxu0 0.0
        %934 = vmatpush.xpose.msra.mxu0 %v918
        %935 = vmatpush.xpose.msra.mxu0 %v916
        %936 = vmatmul.f32.gmra.mxu0 %v914
        %v937 = vpop.f32.mrf.mxu0
        %v938 = vadd.f32 0.0, %v937
        %939 = vdwg.mxu0
        %940 = vrot.lane.b32.xlu0 %v620, 112
        %v941 = vpop.permute.xlu0 %940
        %942 = vrot.lane.b32.xlu0 %v578, 112
        %v943 = vpop.permute.xlu0 %942
        %944 = vrot.lane.b32.xlu0 %v581, 112
        %v945 = vpop.permute.xlu0 %944
        %v946 = vsel %vm621, %v941, 0
        %v948 = vsel %vm621, %v943, 0
        %v950 = vsel %vm621, %v945, 0
        %952 = vmatpush.xpose.msra.mxu0 0.0
        %953 = vmatpush.xpose.msra.mxu0 0.0
        %954 = vmatpush.xpose.msra.mxu0 0.0
        %955 = vmatpush.xpose.msra.mxu0 0.0
        %956 = vmatpush.xpose.msra.mxu0 0.0
        %957 = vmatpush.xpose.msra.mxu0 0.0
        %958 = vmatpush.xpose.msra.mxu0 0.0
        %959 = vmatpush.xpose.msra.mxu0 0.0
        %960 = vmatpush.xpose.msra.mxu0 0.0
        %961 = vmatpush.xpose.msra.mxu0 0.0
        %962 = vmatpush.xpose.msra.mxu0 0.0
        %963 = vmatpush.xpose.msra.mxu0 0.0
        %964 = vmatpush.xpose.msra.mxu0 0.0
        %965 = vmatpush.xpose.msra.mxu0 0.0
        %966 = vmatpush.xpose.msra.mxu0 %v950
        %967 = vmatpush.xpose.msra.mxu0 %v948
        %968 = vmatmul.f32.gmra.mxu0 %v946
        %v969 = vpop.f32.mrf.mxu0
        %v970 = vadd.f32 0.0, %v969
        %971 = vdwg.mxu0
        %v972 = vsel %vm504, %v938, -inf
        %973 = vmax.xlane.f32.xlu0 %v972
        %v974 = vpop.xlane.xlu0 %973
        %v975 = vsel %vm504, %v970, -inf
        %976 = vmax.xlane.f32.xlu0 %v975
        %v977 = vpop.xlane.xlu0 %976
        %v978 = vsub.f32 %v938, %v974
        %v979 = vsub.f32 %v970, %v977
        %v980 = vmul.f32 %v978, 1.442695
        %v981 = vpow.pop %v980
        %v982 = vmul.f32 %v979, 1.442695
        %v983 = vpow.pop %v982
        %v984 = vsel %vm504, %v981, 0.0
        %985 = vadd.xlane.f32.xlu0 %v984
        %v986 = vpop.xlane.xlu0 %985
        %v987 = vsel %vm504, %v983, 0.0
        %988 = vadd.xlane.f32.xlu0 %v987
        %v989 = vpop.xlane.xlu0 %988
        %v990 = vrcp.pop %v986
        %v991 = vrcp.pop %v989
        %v992 = vmul.f32 %v981, %v990
        %v993 = vmul.f32 %v983, %v991
        %994 = vrot.lane.b32.xlu0 %v608, 112
        %v995 = vpop.permute.xlu0 %994
        %996 = vrot.lane.b32.xlu0 %v611, 112
        %v997 = vpop.permute.xlu0 %996
        %v1001 = vsel %vm504, %v992, 0
        %1003 = vmatpush.msra.mxu0 0.0
        %1004 = vmatpush.msra.mxu0 0.0
        %1005 = vmatpush.msra.mxu0 0.0
        %1006 = vmatpush.msra.mxu0 0.0
        %1007 = vmatpush.msra.mxu0 0.0
        %1008 = vmatpush.msra.mxu0 0.0
        %1009 = vmatpush.msra.mxu0 0.0
        %1010 = vmatpush.msra.mxu0 0.0
        %1011 = vmatpush.msra.mxu0 0.0
        %1012 = vmatpush.msra.mxu0 0.0
        %1013 = vmatpush.msra.mxu0 0.0
        %1014 = vmatpush.msra.mxu0 0.0
        %1015 = vmatpush.msra.mxu0 0.0
        %1016 = vmatpush.msra.mxu0 0.0
        %1017 = vmatpush.msra.mxu0 %v997
        %1018 = vmatpush.msra.mxu0 %v995
        %1019 = vmatmul.f32.gmra.mxu0 %v1001
        %v1020 = vpop.f32.mrf.mxu0
        %v1021 = vadd.f32 0.0, %v1020
        %1022 = vdwg.mxu0
        %1023 = vrot.lane.b32.xlu0 %v614, 112
        %v1024 = vpop.permute.xlu0 %1023
        %1025 = vrot.lane.b32.xlu0 %v617, 112
        %v1026 = vpop.permute.xlu0 %1025
        %v1030 = vsel %vm504, %v993, 0
        %1032 = vmatpush.msra.mxu0 0.0
        %1033 = vmatpush.msra.mxu0 0.0
        %1034 = vmatpush.msra.mxu0 0.0
        %1035 = vmatpush.msra.mxu0 0.0
        %1036 = vmatpush.msra.mxu0 0.0
        %1037 = vmatpush.msra.mxu0 0.0
        %1038 = vmatpush.msra.mxu0 0.0
        %1039 = vmatpush.msra.mxu0 0.0
        %1040 = vmatpush.msra.mxu0 0.0
        %1041 = vmatpush.msra.mxu0 0.0
        %1042 = vmatpush.msra.mxu0 0.0
        %1043 = vmatpush.msra.mxu0 0.0
        %1044 = vmatpush.msra.mxu0 0.0
        %1045 = vmatpush.msra.mxu0 0.0
        %1046 = vmatpush.msra.mxu0 %v1026
        %1047 = vmatpush.msra.mxu0 %v1024
        %1048 = vmatmul.f32.gmra.mxu0 %v1030
        %v1049 = vpop.f32.mrf.mxu0
        %v1050 = vadd.f32 0.0, %v1049
        %1051 = vdwg.mxu0
        %1054 = vrot.lane.b32.xlu0 %v1021, 16
        %v1055 = vpop.permute.xlu0 %1054
        %1056 = vrot.lane.b32.xlu0 %v1050, 16
        %v1057 = vpop.permute.xlu0 %1056
        %v1060 = vadd.f32 %v529, %v1055
        %v1061 = vadd.f32 %v532, %v1057
        %1062 = vrot.lane.b32.xlu0 %v619, 104
        %v1063 = vpop.permute.xlu0 %1062
        %1064 = vrot.lane.b32.xlu0 %v572, 104
        %v1065 = vpop.permute.xlu0 %1064
        %1066 = vrot.lane.b32.xlu0 %v575, 104
        %v1067 = vpop.permute.xlu0 %1066
        %v1068 = vsel %vm621, %v1063, 0
        %v1070 = vsel %vm621, %v1065, 0
        %v1072 = vsel %vm621, %v1067, 0
        %1074 = vmatpush.xpose.msra.mxu0 0.0
        %1075 = vmatpush.xpose.msra.mxu0 0.0
        %1076 = vmatpush.xpose.msra.mxu0 0.0
        %1077 = vmatpush.xpose.msra.mxu0 0.0
        %1078 = vmatpush.xpose.msra.mxu0 0.0
        %1079 = vmatpush.xpose.msra.mxu0 0.0
        %1080 = vmatpush.xpose.msra.mxu0 0.0
        %1081 = vmatpush.xpose.msra.mxu0 0.0
        %1082 = vmatpush.xpose.msra.mxu0 0.0
        %1083 = vmatpush.xpose.msra.mxu0 0.0
        %1084 = vmatpush.xpose.msra.mxu0 0.0
        %1085 = vmatpush.xpose.msra.mxu0 0.0
        %1086 = vmatpush.xpose.msra.mxu0 0.0
        %1087 = vmatpush.xpose.msra.mxu0 0.0
        %1088 = vmatpush.xpose.msra.mxu0 %v1072
        %1089 = vmatpush.xpose.msra.mxu0 %v1070
        %1090 = vmatmul.f32.gmra.mxu0 %v1068
        %v1091 = vpop.f32.mrf.mxu0
        %v1092 = vadd.f32 0.0, %v1091
        %1093 = vdwg.mxu0
        %1094 = vrot.lane.b32.xlu0 %v620, 104
        %v1095 = vpop.permute.xlu0 %1094
        %1096 = vrot.lane.b32.xlu0 %v578, 104
        %v1097 = vpop.permute.xlu0 %1096
        %1098 = vrot.lane.b32.xlu0 %v581, 104
        %v1099 = vpop.permute.xlu0 %1098
        %v1100 = vsel %vm621, %v1095, 0
        %v1102 = vsel %vm621, %v1097, 0
        %v1104 = vsel %vm621, %v1099, 0
        %1106 = vmatpush.xpose.msra.mxu0 0.0
        %1107 = vmatpush.xpose.msra.mxu0 0.0
        %1108 = vmatpush.xpose.msra.mxu0 0.0
        %1109 = vmatpush.xpose.msra.mxu0 0.0
        %1110 = vmatpush.xpose.msra.mxu0 0.0
        %1111 = vmatpush.xpose.msra.mxu0 0.0
        %1112 = vmatpush.xpose.msra.mxu0 0.0
        %1113 = vmatpush.xpose.msra.mxu0 0.0
        %1114 = vmatpush.xpose.msra.mxu0 0.0
        %1115 = vmatpush.xpose.msra.mxu0 0.0
        %1116 = vmatpush.xpose.msra.mxu0 0.0
        %1117 = vmatpush.xpose.msra.mxu0 0.0
        %1118 = vmatpush.xpose.msra.mxu0 0.0
        %1119 = vmatpush.xpose.msra.mxu0 0.0
        %1120 = vmatpush.xpose.msra.mxu0 %v1104
        %1121 = vmatpush.xpose.msra.mxu0 %v1102
        %1122 = vmatmul.f32.gmra.mxu0 %v1100
        %v1123 = vpop.f32.mrf.mxu0
        %v1124 = vadd.f32 0.0, %v1123
        %1125 = vdwg.mxu0
        %v1126 = vsel %vm504, %v1092, -inf
        %1127 = vmax.xlane.f32.xlu0 %v1126
        %v1128 = vpop.xlane.xlu0 %1127
        %v1129 = vsel %vm504, %v1124, -inf
        %1130 = vmax.xlane.f32.xlu0 %v1129
        %v1131 = vpop.xlane.xlu0 %1130
        %v1132 = vsub.f32 %v1092, %v1128
        %v1133 = vsub.f32 %v1124, %v1131
        %v1134 = vmul.f32 %v1132, 1.442695
        %v1135 = vpow.pop %v1134
        %v1136 = vmul.f32 %v1133, 1.442695
        %v1137 = vpow.pop %v1136
        %v1138 = vsel %vm504, %v1135, 0.0
        %1139 = vadd.xlane.f32.xlu0 %v1138
        %v1140 = vpop.xlane.xlu0 %1139
        %v1141 = vsel %vm504, %v1137, 0.0
        %1142 = vadd.xlane.f32.xlu0 %v1141
        %v1143 = vpop.xlane.xlu0 %1142
        %v1144 = vrcp.pop %v1140
        %v1145 = vrcp.pop %v1143
        %v1146 = vmul.f32 %v1135, %v1144
        %v1147 = vmul.f32 %v1137, %v1145
        %1148 = vrot.lane.b32.xlu0 %v608, 104
        %v1149 = vpop.permute.xlu0 %1148
        %1150 = vrot.lane.b32.xlu0 %v611, 104
        %v1151 = vpop.permute.xlu0 %1150
        %v1155 = vsel %vm504, %v1146, 0
        %1157 = vmatpush.msra.mxu0 0.0
        %1158 = vmatpush.msra.mxu0 0.0
        %1159 = vmatpush.msra.mxu0 0.0
        %1160 = vmatpush.msra.mxu0 0.0
        %1161 = vmatpush.msra.mxu0 0.0
        %1162 = vmatpush.msra.mxu0 0.0
        %1163 = vmatpush.msra.mxu0 0.0
        %1164 = vmatpush.msra.mxu0 0.0
        %1165 = vmatpush.msra.mxu0 0.0
        %1166 = vmatpush.msra.mxu0 0.0
        %1167 = vmatpush.msra.mxu0 0.0
        %1168 = vmatpush.msra.mxu0 0.0
        %1169 = vmatpush.msra.mxu0 0.0
        %1170 = vmatpush.msra.mxu0 0.0
        %1171 = vmatpush.msra.mxu0 %v1151
        %1172 = vmatpush.msra.mxu0 %v1149
        %1173 = vmatmul.f32.gmra.mxu0 %v1155
        %v1174 = vpop.f32.mrf.mxu0
        %v1175 = vadd.f32 0.0, %v1174
        %1176 = vdwg.mxu0
        %1177 = vrot.lane.b32.xlu0 %v614, 104
        %v1178 = vpop.permute.xlu0 %1177
        %1179 = vrot.lane.b32.xlu0 %v617, 104
        %v1180 = vpop.permute.xlu0 %1179
        %v1184 = vsel %vm504, %v1147, 0
        %1186 = vmatpush.msra.mxu0 0.0
        %1187 = vmatpush.msra.mxu0 0.0
        %1188 = vmatpush.msra.mxu0 0.0
        %1189 = vmatpush.msra.mxu0 0.0
        %1190 = vmatpush.msra.mxu0 0.0
        %1191 = vmatpush.msra.mxu0 0.0
        %1192 = vmatpush.msra.mxu0 0.0
        %1193 = vmatpush.msra.mxu0 0.0
        %1194 = vmatpush.msra.mxu0 0.0
        %1195 = vmatpush.msra.mxu0 0.0
        %1196 = vmatpush.msra.mxu0 0.0
        %1197 = vmatpush.msra.mxu0 0.0
        %1198 = vmatpush.msra.mxu0 0.0
        %1199 = vmatpush.msra.mxu0 0.0
        %1200 = vmatpush.msra.mxu0 %v1180
        %1201 = vmatpush.msra.mxu0 %v1178
        %1202 = vmatmul.f32.gmra.mxu0 %v1184
        %v1203 = vpop.f32.mrf.mxu0
        %v1204 = vadd.f32 0.0, %v1203
        %1205 = vdwg.mxu0
        %1208 = vrot.lane.b32.xlu0 %v1175, 24
        %v1209 = vpop.permute.xlu0 %1208
        %1210 = vrot.lane.b32.xlu0 %v1204, 24
        %v1211 = vpop.permute.xlu0 %1210
        %v1214 = vadd.f32 %v529, %v1209
        %v1215 = vadd.f32 %v532, %v1211
        %v1216 = vsel %vm621, %v748, %v906
        %v1217 = vsel %vm621, %v749, %v907
        %v1218 = vsel %vm504, %v1216, %v1060
        %v1219 = vsel %vm504, %v1217, %v1061
        %v1220 = vsel %vm541, %v1218, %v1214
        %v1221 = vsel %vm541, %v1219, %v1215
        %v1222 = vld [vmem:[#allocation11] sm:$0xff]
        %v1223 = vld [vmem:[#allocation11 + $0x8] sm:$0xff]
        %v1224 = vld [vmem:[#allocation11 + $0x10] sm:$0xff]
        %v1225 = vld [vmem:[#allocation11 + $0x18] sm:$0xff]
        %v1226 = vld [vmem:[%s9] sm:$0x1]
        %v1228 = vperm.slane %v1226, 0
        %vm1230 = vcmask 261120
        %v1232 = vsel %vm1230, %v1220, 0
        %v1235 = vsel %vm1230, %v1221, 0
        %1237 = vmatpush.msra.mxu0 0.0
        %1238 = vmatpush.msra.mxu0 0.0
        %1239 = vmatpush.msra.mxu0 0.0
        %1240 = vmatpush.msra.mxu0 0.0
        %1241 = vmatpush.msra.mxu0 0.0
        %1242 = vmatpush.msra.mxu0 0.0
        %1243 = vmatpush.msra.mxu0 0.0
        %1244 = vmatpush.msra.mxu0 0.0
        %1245 = vmatpush.msra.mxu0 0.0
        %1246 = vmatpush.msra.mxu0 0.0
        %1247 = vmatpush.msra.mxu0 0.0
        %1248 = vmatpush.msra.mxu0 0.0
        %1249 = vmatpush.msra.mxu0 %v1225
        %1250 = vmatpush.msra.mxu0 %v1224
        %1251 = vmatpush.msra.mxu0 %v1223
        %1252 = vmatpush.msra.mxu0 %v1222
        %1253 = vmatmul.f32.gmra.mxu0 %v1232
        %v1254 = vpop.f32.mrf.mxu0
        %v1255 = vadd.f32 %v1228, %v1254
        %1256 = vmatmul.f32.gmra.mxu0 %v1235
        %v1257 = vpop.f32.mrf.mxu0
        %v1258 = vadd.f32 %v1228, %v1257
        %1259 = vdwg.mxu0
        %v1260 = vmax.f32 %v1255, 0.0
        %v1261 = vmax.f32 %v1258, 0.0
        %v1262 = vadd.f32 %v1220, %v1260
        %v1263 = vadd.f32 %v1221, %v1261
        %1264 = vst.msk [vmem:[%s488] sm:$0xff] %vm1230, %v1262
        %1265 = vst.msk [vmem:[%s488 + $0x8] sm:$0xff] %vm1230, %v1263
        %s1266 = sand.u32 %s260, 1
        %s1267 = scalar_lea.sflag [#allocation4], %s1266
        %s1268 = sand.u32 %s260, 1
        %s1269 = smul.addr %s1268, 16
        %s1270 = scalar_lea.vmem [#allocation13], %s1269
        // Predicated region
        $region85: #{tpu_custom_call.1} parent=59 // pred_check
          %p1271 = pneg %p270
        $region86: #{tpu_custom_call.1} parent=59 // pred_check_branch
          %1273 = sbr.rel (%p1271) target = $region88
        $region87: #{tpu_custom_call.1} parent=59 // pred_region
          %s1274 = smul.u32 2, %s32
          %1276 = vsyncadd %s1267, 0
          %s1277 = smul.addr %s1274, 8
          %s1278 = scalar_lea.hbm %s10, %s1277
          %s1279 = sshll.u32 %s1270, 4
          %s1280 = int_to_ptr.vmem [resolvable:$true] %s1279
          %s1281 = sshll.u32 %s1278, 4
          %s1282 = int_to_ptr.hbm [resolvable:$true] %s1281
          %1287 = dma.vmem_to_hbm [thread:$0]  %s1280, 256, %s1282, %s1267, 128, 128, 8
        $region88: #{tpu_custom_call.1} parent=59 // pred_fallthru
          _
      $region60: #{tpu_custom_call.1} parent=5 // pred_fallthru
        _
      %p1288 = scmp.le.s32.totalorder 2, %s27
      // Predicated region
      $region89: #{tpu_custom_call.1} parent=5 // pred_check
        %p1289 = pneg %p1288
      $region90: #{tpu_custom_call.1} parent=5 // pred_check_branch
        %1291 = sbr.rel (%p1289) target = $region92
      $region91: #{tpu_custom_call.1} parent=5 // pred_region
        %s1292 = ssub.s32 %s27, 2
        // Predicated region
        $region93: #{tpu_custom_call.1} parent=91 // pred_check
          %p1293 = pneg %p276
        $region94: #{tpu_custom_call.1} parent=91 // pred_check_branch
          %1295 = sbr.rel (%p1293) target = $region96
        $region95: #{tpu_custom_call.1} parent=91 // pred_region
          %s1296 = sand.u32 %s261, 1
          %s1297 = scalar_lea.sflag [#allocation4], %s1296
          %s1298 = sand.u32 %s261, 1
          %s1299 = smul.addr %s1298, 16
          %s1300 = scalar_lea.vmem [#allocation13], %s1299
          %1302 = dma.done %s1297, 256
        $region96: #{tpu_custom_call.1} parent=91 // pred_fallthru
          _
      $region92: #{tpu_custom_call.1} parent=5 // pred_fallthru
        _
    $region6: #{tpu_custom_call.1} parent=1 // loop_footer
      %s31 = sadd.s32 1, %s27
    $region7: #{tpu_custom_call.1} parent=1 // loop_footer_branch
      %26 = sbr.rel target = $region3
    $region8: #{tpu_custom_call.1} parent=1 // loop_exit
      _
    %1303 = vsyncpa [#allocation3], 1
    %s1304 = scalar_lea.sflag [#allocation3], 1
    %1305 = vsyncpa %s1304, 1
    %1306 = vsyncpa [#allocation6], 1
    %s1307 = scalar_lea.sflag [#allocation6], 1
    %1308 = vsyncpa %s1307, 1
    %1309 = vsyncpa [#allocation9], 1
    %1310 = vsyncpa [#allocation12], 1
    %1311 = vsyncpa [#allocation4], 1
    %s1312 = scalar_lea.sflag [#allocation4], 1
    %1313 = vsyncpa %s1312, 1

</llo_original>
